<compile_context>
chip_gen: v7x
topology: tpu7x:2x2x1
jax: 0.10.0
libtpu: 0.0.40
codegen_flags: <defaults>
</compile_context>

<pallas_src>
import math

import jax
import jax.numpy as jnp
from jax.experimental import pallas as pl
from jax.experimental.pallas import tpu as pltpu

NEURON = 100          # hidden width in the PyTorch module
F_PAD = 128           # padded feature width (lane-aligned)
N_LAYERS = 7          # lin1..lin7


def _round_up(v, m):
    return ((v + m - 1) // m) * m


def _mlp_kernel(x_ref, w1_ref, wh_ref, w7_ref, bh_ref, b7_ref, o_ref):
    """Full forward pass for one batch tile. All refs live in VMEM."""
    x = x_ref[...]                       # (tb, 2)   f32
    w1 = w1_ref[...]                     # (2, 128)  f32

    # Layer 1 on the VPU: K=2 contraction as two rank-1 updates.
    h = jnp.tanh(
        x[:, 0:1] * w1[0:1, :] + x[:, 1:2] * w1[1:2, :] + bh_ref[0:1, :]
    )                                    # (tb, 128) f32

    mm_dtype = wh_ref.dtype              # f32 or bf16 (chosen at pack time)

    # Layers 2..6 on the MXU (f32 accumulation), bias add + tanh in f32.
    for li in range(5):
        z = jnp.dot(h.astype(mm_dtype), wh_ref[li],
                    preferred_element_type=jnp.float32)
        h = jnp.tanh(z + bh_ref[li + 1:li + 2, :])

    # Final linear layer (lin7): (tb,128) x (128,1) -> (tb,1); no activation.
    o_ref[...] = (
        jnp.dot(h.astype(mm_dtype), w7_ref[...],
                preferred_element_type=jnp.float32)
        + b7_ref[...]
    )


def pack_params(weights, biases, matmul_dtype=jnp.float32):
    """Pad & stack parameters once (do this at init time, not per forward).

    weights[i]: (in_i, out_i) already transposed vs torch (x @ W).
    matmul_dtype: dtype used for the MXU matmul inputs (f32 or bf16);
                  bias add / tanh always stay f32."""
    w1 = jnp.zeros((2, F_PAD), jnp.float32)
    w1 = w1.at[:, : weights[0].shape[1]].set(weights[0].astype(jnp.float32))

    w_hid = jnp.zeros((5, F_PAD, F_PAD), matmul_dtype)
    for li in range(1, 6):
        w = weights[li]
        w_hid = w_hid.at[li - 1, : w.shape[0], : w.shape[1]].set(
            w.astype(matmul_dtype))

    w7 = jnp.zeros((F_PAD, 1), matmul_dtype)
    w7 = w7.at[: weights[6].shape[0], :].set(weights[6].astype(matmul_dtype))

    b_hid = jnp.zeros((6, F_PAD), jnp.float32)
    for li in range(6):
        b_hid = b_hid.at[li, : biases[li].shape[0]].set(
            biases[li].astype(jnp.float32))

    b7 = biases[6].reshape(1, 1).astype(jnp.float32)
    return (w1, w_hid, w7, b_hid, b7)


def net_forward_pallas(x, packed_params, *, tb=2048):
    """x: (N, 2) f32.  packed_params: output of pack_params().
    Returns (N, 1) f32, identical semantics to Net.forward."""
    w1, w_hid, w7, b_hid, b7 = packed_params
    N = x.shape[0]

    # Effective batch tile: cap at tb, keep grid >= 2 when N allows so the
    # "parallel" axis can shard across v7x's 2 TensorCores, round to sublanes.
    tb_eff = min(tb, max(8, _round_up(pl.cdiv(N, 2), 8)))
    n_pad = _round_up(N, tb_eff)
    if n_pad != N:
        x = jnp.pad(x, ((0, n_pad - N), (0, 0)))

    grid = (n_pad // tb_eff,)

    out = pl.pallas_call(
        _mlp_kernel,
        out_shape=jax.ShapeDtypeStruct((n_pad, 1), jnp.float32),
        grid_spec=pltpu.PrefetchScalarGridSpec(
            num_scalar_prefetch=0,
            grid=grid,
            in_specs=[
                pl.BlockSpec((tb_eff, 2), lambda i: (i, 0)),          # x
                pl.BlockSpec((2, F_PAD), lambda i: (0, 0)),           # w1
                pl.BlockSpec((5, F_PAD, F_PAD), lambda i: (0, 0, 0)),  # w2..w6
                pl.BlockSpec((F_PAD, 1), lambda i: (0, 0)),           # w7
                pl.BlockSpec((6, F_PAD), lambda i: (0, 0)),           # b1..b6
                pl.BlockSpec((1, 1), lambda i: (0, 0)),               # b7
            ],
            out_specs=pl.BlockSpec((tb_eff, 1), lambda i: (i, 0)),
        ),
        compiler_params=pltpu.CompilerParams(
            dimension_semantics=("parallel",)
        ),
    )(x, w1, w_hid, w7, b_hid, b7)

    return out[:N]


def init_params(key):
    """Deterministic parameter init mirroring the module's __init__:
    xavier_normal_ weights, PyTorch-default uniform biases."""
    dims = [2] + [NEURON] * 6 + [1]
    weights, biases = [], []
    for li in range(N_LAYERS):
        fan_in, fan_out = dims[li], dims[li + 1]
        key, kw, kb = jax.random.split(key, 3)
        std = math.sqrt(2.0 / (fan_in + fan_out))     # xavier normal gain=1
        w = std * jax.random.normal(kw, (fan_in, fan_out), jnp.float32)
        bound = 1.0 / math.sqrt(fan_in)               # torch Linear bias default
        b = jax.random.uniform(kb, (fan_out,), jnp.float32, -bound, bound)
        weights.append(w)
        biases.append(b)
    return weights, biases


def net_forward_ref(x, weights, biases):
    """Pure-JAX f32 reference (semantic ground truth)."""
    h = x
    for li in range(6):
        h = jnp.tanh(h @ weights[li] + biases[li])
    return h @ weights[6] + biases[6]


def net_forward_ref_mixed(x, weights, biases, matmul_dtype):
    """Pure-JAX reference mirroring the kernel's mixed-precision structure
    (layer 1 on VPU in f32, matmuls in matmul_dtype with f32 accumulation)."""
    w1 = weights[0]
    h = jnp.tanh(x[:, 0:1] * w1[0:1, :] + x[:, 1:2] * w1[1:2, :] + biases[0])
    for li in range(1, 6):
        z = jnp.dot(h.astype(matmul_dtype), weights[li].astype(matmul_dtype),
                    preferred_element_type=jnp.float32)
        h = jnp.tanh(z + biases[li])
    return jnp.dot(h.astype(matmul_dtype), weights[6].astype(matmul_dtype),
                   preferred_element_type=jnp.float32) + biases[6]


if __name__ == "__main__":
    key = jax.random.PRNGKey(0)
    key, kx = jax.random.split(key)

    N = 256  # batch of 2-D (x, y) collocation points, as in Net.forward
    x = jax.random.uniform(kx, (N, 2), jnp.float32)

    weights, biases = init_params(key)
    ref = net_forward_ref(x, weights, biases)

    # ---- f32 matmul path (exact semantics) ----
    params_f32 = pack_params(weights, biases, matmul_dtype=jnp.float32)
    out = jax.block_until_ready(net_forward_pallas(x, params_f32))
    assert out.shape == (N, 1)
    assert jnp.allclose(out, ref, atol=1e-5, rtol=1e-5)

    # ---- bf16 matmul path (faster MXU; f32 accumulation/bias/tanh) ----
    params_bf16 = pack_params(weights, biases, matmul_dtype=jnp.bfloat16)
    out_bf = jax.block_until_ready(net_forward_pallas(x, params_bf16))
    ref_bf = net_forward_ref_mixed(x, weights, biases, jnp.bfloat16)
    # Structural check: kernel matches an identically-quantized JAX reference.
    assert jnp.allclose(out_bf, ref_bf, atol=1e-3, rtol=1e-3)
    # Accuracy gate vs the exact f32 reference (loose; PINN users may prefer f32).
    assert jnp.allclose(out_bf, ref, atol=5e-2, rtol=0)

    print("KERNEL_OK")
</pallas_src>

<mosaic_0001>
module attributes {stable_mosaic.version = 11 : i64} {
  func.func @_mlp_kernel(%arg0: i32, %arg1: memref<128x2xf32, #tpu.memory_space<vmem>>, %arg2: memref<2x128xf32, #tpu.memory_space<vmem>>, %arg3: memref<5x128x128xf32, #tpu.memory_space<vmem>>, %arg4: memref<128x1xf32, #tpu.memory_space<vmem>>, %arg5: memref<6x128xf32, #tpu.memory_space<vmem>>, %arg6: memref<1x1xf32, #tpu.memory_space<vmem>>, %arg7: memref<128x1xf32, #tpu.memory_space<vmem>>) attributes {dimension_semantics = [#tpu.dimension_semantics<parallel>], iteration_bounds = array<i64: 2>, scalar_prefetch = 0 : i64, scratch_operands = 0 : i64, tpu.core_type = #tpu.core_type<tc>, window_params = [{transform_indices = @transform_0, window_bounds = array<i64: 128, 2>}, {pipeline_mode = #tpu.pipeline_mode<synchronous>, transform_indices = @transform_1, window_bounds = array<i64: 2, 128>}, {pipeline_mode = #tpu.pipeline_mode<synchronous>, transform_indices = @transform_2, window_bounds = array<i64: 5, 128, 128>}, {pipeline_mode = #tpu.pipeline_mode<synchronous>, transform_indices = @transform_3, window_bounds = array<i64: 128, 1>}, {pipeline_mode = #tpu.pipeline_mode<synchronous>, transform_indices = @transform_4, window_bounds = array<i64: 6, 128>}, {pipeline_mode = #tpu.pipeline_mode<synchronous>, transform_indices = @transform_5, window_bounds = array<i64: 1, 1>}, {transform_indices = @transform_6, window_bounds = array<i64: 128, 1>}]} {
    %c0 = arith.constant 0 : index
    %c0_0 = arith.constant 0 : index
    %0 = vector.load %arg1[%c0, %c0_0] : memref<128x2xf32, #tpu.memory_space<vmem>>, vector<128x2xf32>
    %c0_1 = arith.constant 0 : index
    %c0_2 = arith.constant 0 : index
    %1 = vector.load %arg2[%c0_1, %c0_2] : memref<2x128xf32, #tpu.memory_space<vmem>>, vector<2x128xf32>
    %2 = vector.extract_strided_slice %0 {offsets = [0, 0], sizes = [128, 1], strides = [1, 1]} : vector<128x2xf32> to vector<128x1xf32>
    %3 = vector.extract_strided_slice %1 {offsets = [0, 0], sizes = [1, 128], strides = [1, 1]} : vector<2x128xf32> to vector<1x128xf32>
    %4 = vector.broadcast %2 : vector<128x1xf32> to vector<128x128xf32>
    %5 = vector.broadcast %3 : vector<1x128xf32> to vector<128x128xf32>
    %6 = arith.mulf %4, %5 : vector<128x128xf32>
    %7 = vector.extract_strided_slice %0 {offsets = [0, 1], sizes = [128, 1], strides = [1, 1]} : vector<128x2xf32> to vector<128x1xf32>
    %8 = vector.extract_strided_slice %1 {offsets = [1, 0], sizes = [1, 128], strides = [1, 1]} : vector<2x128xf32> to vector<1x128xf32>
    %9 = vector.broadcast %7 : vector<128x1xf32> to vector<128x128xf32>
    %10 = vector.broadcast %8 : vector<1x128xf32> to vector<128x128xf32>
    %11 = arith.mulf %9, %10 : vector<128x128xf32>
    %12 = arith.addf %6, %11 : vector<128x128xf32>
    %c0_3 = arith.constant 0 : index
    %c0_4 = arith.constant 0 : index
    %13 = vector.load %arg5[%c0_3, %c0_4] : memref<6x128xf32, #tpu.memory_space<vmem>>, vector<1x128xf32>
    %14 = vector.broadcast %13 : vector<1x128xf32> to vector<128x128xf32>
    %15 = arith.addf %12, %14 : vector<128x128xf32>
    %16 = math.tanh %15 : vector<128x128xf32>
    %c0_5 = arith.constant 0 : index
    %c0_6 = arith.constant 0 : index
    %c0_7 = arith.constant 0 : index
    %17 = vector.load %arg3[%c0_5, %c0_6, %c0_7] : memref<5x128x128xf32, #tpu.memory_space<vmem>>, vector<1x128x128xf32>
    %18 = vector.shape_cast %17 : vector<1x128x128xf32> to vector<128x128xf32>
    %cst = arith.constant dense<0.000000e+00> : vector<128x128xf32>
    %19 = tpu.matmul %16, %18, %cst {dimension_numbers = #tpu.dot_dimension_numbers<[1], [0], [0], [1], [0, 0, 1, 1], [], []>} : vector<128x128xf32>, vector<128x128xf32>, vector<128x128xf32> -> vector<128x128xf32>
    %c1 = arith.constant 1 : index
    %c0_8 = arith.constant 0 : index
    %20 = vector.load %arg5[%c1, %c0_8] : memref<6x128xf32, #tpu.memory_space<vmem>>, vector<1x128xf32>
    %21 = vector.broadcast %20 : vector<1x128xf32> to vector<128x128xf32>
    %22 = arith.addf %19, %21 : vector<128x128xf32>
    %23 = math.tanh %22 : vector<128x128xf32>
    %c1_9 = arith.constant 1 : index
    %c0_10 = arith.constant 0 : index
    %c0_11 = arith.constant 0 : index
    %24 = vector.load %arg3[%c1_9, %c0_10, %c0_11] : memref<5x128x128xf32, #tpu.memory_space<vmem>>, vector<1x128x128xf32>
    %25 = vector.shape_cast %24 : vector<1x128x128xf32> to vector<128x128xf32>
    %cst_12 = arith.constant dense<0.000000e+00> : vector<128x128xf32>
    %26 = tpu.matmul %23, %25, %cst_12 {dimension_numbers = #tpu.dot_dimension_numbers<[1], [0], [0], [1], [0, 0, 1, 1], [], []>} : vector<128x128xf32>, vector<128x128xf32>, vector<128x128xf32> -> vector<128x128xf32>
    %c2 = arith.constant 2 : index
    %c0_13 = arith.constant 0 : index
    %27 = vector.load %arg5[%c2, %c0_13] : memref<6x128xf32, #tpu.memory_space<vmem>>, vector<1x128xf32>
    %28 = vector.broadcast %27 : vector<1x128xf32> to vector<128x128xf32>
    %29 = arith.addf %26, %28 : vector<128x128xf32>
    %30 = math.tanh %29 : vector<128x128xf32>
    %c2_14 = arith.constant 2 : index
    %c0_15 = arith.constant 0 : index
    %c0_16 = arith.constant 0 : index
    %31 = vector.load %arg3[%c2_14, %c0_15, %c0_16] : memref<5x128x128xf32, #tpu.memory_space<vmem>>, vector<1x128x128xf32>
    %32 = vector.shape_cast %31 : vector<1x128x128xf32> to vector<128x128xf32>
    %cst_17 = arith.constant dense<0.000000e+00> : vector<128x128xf32>
    %33 = tpu.matmul %30, %32, %cst_17 {dimension_numbers = #tpu.dot_dimension_numbers<[1], [0], [0], [1], [0, 0, 1, 1], [], []>} : vector<128x128xf32>, vector<128x128xf32>, vector<128x128xf32> -> vector<128x128xf32>
    %c3 = arith.constant 3 : index
    %c0_18 = arith.constant 0 : index
    %34 = vector.load %arg5[%c3, %c0_18] : memref<6x128xf32, #tpu.memory_space<vmem>>, vector<1x128xf32>
    %35 = vector.broadcast %34 : vector<1x128xf32> to vector<128x128xf32>
    %36 = arith.addf %33, %35 : vector<128x128xf32>
    %37 = math.tanh %36 : vector<128x128xf32>
    %c3_19 = arith.constant 3 : index
    %c0_20 = arith.constant 0 : index
    %c0_21 = arith.constant 0 : index
    %38 = vector.load %arg3[%c3_19, %c0_20, %c0_21] : memref<5x128x128xf32, #tpu.memory_space<vmem>>, vector<1x128x128xf32>
    %39 = vector.shape_cast %38 : vector<1x128x128xf32> to vector<128x128xf32>
    %cst_22 = arith.constant dense<0.000000e+00> : vector<128x128xf32>
    %40 = tpu.matmul %37, %39, %cst_22 {dimension_numbers = #tpu.dot_dimension_numbers<[1], [0], [0], [1], [0, 0, 1, 1], [], []>} : vector<128x128xf32>, vector<128x128xf32>, vector<128x128xf32> -> vector<128x128xf32>
    %c4 = arith.constant 4 : index
    %c0_23 = arith.constant 0 : index
    %41 = vector.load %arg5[%c4, %c0_23] : memref<6x128xf32, #tpu.memory_space<vmem>>, vector<1x128xf32>
    %42 = vector.broadcast %41 : vector<1x128xf32> to vector<128x128xf32>
    %43 = arith.addf %40, %42 : vector<128x128xf32>
    %44 = math.tanh %43 : vector<128x128xf32>
    %c4_24 = arith.constant 4 : index
    %c0_25 = arith.constant 0 : index
    %c0_26 = arith.constant 0 : index
    %45 = vector.load %arg3[%c4_24, %c0_25, %c0_26] : memref<5x128x128xf32, #tpu.memory_space<vmem>>, vector<1x128x128xf32>
    %46 = vector.shape_cast %45 : vector<1x128x128xf32> to vector<128x128xf32>
    %cst_27 = arith.constant dense<0.000000e+00> : vector<128x128xf32>
    %47 = tpu.matmul %44, %46, %cst_27 {dimension_numbers = #tpu.dot_dimension_numbers<[1], [0], [0], [1], [0, 0, 1, 1], [], []>} : vector<128x128xf32>, vector<128x128xf32>, vector<128x128xf32> -> vector<128x128xf32>
    %c5 = arith.constant 5 : index
    %c0_28 = arith.constant 0 : index
    %48 = vector.load %arg5[%c5, %c0_28] : memref<6x128xf32, #tpu.memory_space<vmem>>, vector<1x128xf32>
    %49 = vector.broadcast %48 : vector<1x128xf32> to vector<128x128xf32>
    %50 = arith.addf %47, %49 : vector<128x128xf32>
    %51 = math.tanh %50 : vector<128x128xf32>
    %c0_29 = arith.constant 0 : index
    %c0_30 = arith.constant 0 : index
    %52 = vector.load %arg4[%c0_29, %c0_30] : memref<128x1xf32, #tpu.memory_space<vmem>>, vector<128x1xf32>
    %cst_31 = arith.constant dense<0.000000e+00> : vector<128x1xf32>
    %53 = tpu.matmul %51, %52, %cst_31 {dimension_numbers = #tpu.dot_dimension_numbers<[1], [0], [0], [1], [0, 0, 1, 1], [], []>} : vector<128x128xf32>, vector<128x1xf32>, vector<128x1xf32> -> vector<128x1xf32>
    %c0_32 = arith.constant 0 : index
    %c0_33 = arith.constant 0 : index
    %54 = vector.load %arg6[%c0_32, %c0_33] : memref<1x1xf32, #tpu.memory_space<vmem>>, vector<1x1xf32>
    %55 = vector.broadcast %54 : vector<1x1xf32> to vector<128x1xf32>
    %56 = arith.addf %53, %55 : vector<128x1xf32>
    %c0_34 = arith.constant 0 : index
    %c0_35 = arith.constant 0 : index
    %57 = vector.load %arg7[%c0_34, %c0_35] : memref<128x1xf32, #tpu.memory_space<vmem>>, vector<128x1xf32>
    tpu.vector_store %arg7[%c0_34, %c0_35], %56 {strides = array<i32>} : memref<128x1xf32, #tpu.memory_space<vmem>>, vector<128x1xf32>,
    return
  }
  func.func @transform_0(%arg0: i32) -> (i32, i32) {
    %c0_i32 = arith.constant 0 : i32
    %c0_i32_0 = arith.constant 0 : i32
    return %arg0, %c0_i32 : i32, i32
  }
  func.func @transform_1(%arg0: i32) -> (i32, i32) {
    %c0_i32 = arith.constant 0 : i32
    %c0_i32_0 = arith.constant 0 : i32
    %c0_i32_1 = arith.constant 0 : i32
    return %c0_i32, %c0_i32_0 : i32, i32
  }
  func.func @transform_2(%arg0: i32) -> (i32, i32, i32) {
    %c0_i32 = arith.constant 0 : i32
    %c0_i32_0 = arith.constant 0 : i32
    %c0_i32_1 = arith.constant 0 : i32
    %c0_i32_2 = arith.constant 0 : i32
    return %c0_i32, %c0_i32_0, %c0_i32_1 : i32, i32, i32
  }
  func.func @transform_3(%arg0: i32) -> (i32, i32) {
    %c0_i32 = arith.constant 0 : i32
    %c0_i32_0 = arith.constant 0 : i32
    %c0_i32_1 = arith.constant 0 : i32
    return %c0_i32, %c0_i32_0 : i32, i32
  }
  func.func @transform_4(%arg0: i32) -> (i32, i32) {
    %c0_i32 = arith.constant 0 : i32
    %c0_i32_0 = arith.constant 0 : i32
    %c0_i32_1 = arith.constant 0 : i32
    return %c0_i32, %c0_i32_0 : i32, i32
  }
  func.func @transform_5(%arg0: i32) -> (i32, i32) {
    %c0_i32 = arith.constant 0 : i32
    %c0_i32_0 = arith.constant 0 : i32
    %c0_i32_1 = arith.constant 0 : i32
    return %c0_i32, %c0_i32_0 : i32, i32
  }
  func.func @transform_6(%arg0: i32) -> (i32, i32) {
    %c0_i32 = arith.constant 0 : i32
    %c0_i32_0 = arith.constant 0 : i32
    return %arg0, %c0_i32 : i32, i32
  }
}

</mosaic_0001>

<llo_original>
// kernel: tpu_custom_call.1
$region0: #{tpu_custom_call.1}
  #allocation0 [shape = 'u32[]', space=smem, size = 0x4, offset = 0x4, fixed_abs, tag = 'smem constant byte address 0x4 - core index']
  #allocation1 [shape = 'u32[144,128]{1,0:T(1,128)}', space=vmem, size = 0x12000, scoped, tag = 'internal scratch']
  #allocation2 [shape = 'f32[1,1]{1,0:T(1,128)S(1)}', space=vmem, size = 0x200, scoped, tag = 'scoped memory for tpu_custom_call.1']
  %s0 = inlined_call_operand.vmem [shape: f32[256,2], index: 0, kind: input, shape index: {}]
  %s1 = inlined_call_operand.vmem [shape: f32[2,128], index: 1, kind: input, shape index: {}]
  %s2 = inlined_call_operand.hbm [shape: f32[5,128,128], index: 2, kind: input, shape index: {}]
  %s3 = inlined_call_operand.vmem [shape: f32[128,1], index: 3, kind: input, shape index: {}]
  %s4 = inlined_call_operand.vmem [shape: f32[6,128], index: 4, kind: input, shape index: {}]
  %s5 = inlined_call_operand.<no memory space> [shape: f32[1,1], index: 5, kind: input, shape index: {}]
  %s6 = inlined_call_operand.vmem [shape: f32[256,1], index: 6, kind: output, shape index: {}]
  %s7 = sld [smem:[#allocation0]]
  $region61: #{tpu_custom_call.1} parent=0
    _
  %s9 = ssub.s32 1, %s7
  %s10 = scalar_select 0, %s9, %s7
  %v11 = vstv %s5
  %12 = vst [vmem:[#allocation2] sm:$0x1] %v11
  $region1: #{tpu_custom_call.1} parent=0
    #allocation3 [shape = 'u8[327680]{0}', space=vmem, size = 0x50000, scoped, tag = 'input window, operand 2, single buffered']
    #allocation4 [shape = 's32[2]{0}', space=sflag, size = 0x8, scoped, tag = 'scoped memory for tpu_custom_call.1']
    %13 = vsyncpa [#allocation4], 0
    loop: start=0, step=1, limit=4
    $region2: #{tpu_custom_call.1} parent=1 // loop_pre_header
      _
    $region3: #{tpu_custom_call.1} parent=1 // loop_header
      %s15 = sphi 0, %s19
      %p16 = scmp.ge.s32.totalorder %s15, 4
      %s25 = sphi 0, %s27
      %s28 = sphi 0, %s25
      %s29 = sphi 0, %s28
      %s45 = sphi 0, %s29
      %s49 = sphi 0, %s49
      %s51 = sphi 0, %s49
      %s52 = sphi 0, %s51
      %s66 = sphi 0, %s52
      %s70 = sphi 0, %s70
      %s72 = sphi 0, %s70
      %s73 = sphi 0, %s72
      %s87 = sphi 0, %s73
      %s91 = sphi 0, %s91
      %s93 = sphi 0, %s91
      %s94 = sphi 0, %s93
      %s108 = sphi 0, %s94
      %s112 = sphi 0, %s112
      %s114 = sphi 0, %s112
      %s115 = sphi 0, %s114
      %s129 = sphi 0, %s115
      %s133 = sphi 0, %s133
      %s135 = sphi 0, %s133
      %s136 = sphi 0, %s135
      %s150 = sphi 0, %s136
      %s156 = sphi 0, %s158
      %s159 = sphi 0, %s156
      %s160 = sphi 0, %s159
      %s176 = sphi 0, %s160
    $region4: #{tpu_custom_call.1} parent=1 // loop_header_branch
      %18 = sbr.rel (%p16) target = $region8
    $region5: #{tpu_custom_call.1} parent=1 // loop_body
      %s20 = ssub.s32 %s15, 1
      %s21 = ssub.s32 %s15, 2
      %s22 = sadd.s32 %s15, 1
      %s23 = ssub.s32 %s15, %s22
      %p24 = scmp.eq.s32.totalorder %s23, 0
      %s26 = sadd.s32 %s25, 1
      %s27 = scalar_select %p24, %s25, %s26
      %p30 = pneg %p24
      %p31 = scmp.eq.s32.totalorder %s15, 1
      %p32 = por %p30, %p31
      %p33 = scmp.ne.s32.totalorder %s25, %s28
      %p34 = scmp.eq.s32.totalorder %s15, 0
      %p35 = por %p33, %p34
      %p36 = scmp.ne.s32.totalorder %s25, %s28
      %p37 = scmp.eq.s32.totalorder %s20, 1
      %p38 = por %p36, %p37
      %p39 = scmp.ne.s32.totalorder %s28, %s29
      %p40 = scmp.eq.s32.totalorder %s20, 0
      %p41 = por %p39, %p40
      %p42 = scmp.ne.s32.totalorder %s28, %s29
      %p43 = scmp.eq.s32.totalorder %s21, 1
      %p44 = por %p42, %p43
      %p46 = scmp.ne.s32.totalorder %s29, %s45
      %p47 = scmp.eq.s32.totalorder %s21, 0
      %p48 = por %p46, %p47
      %s50 = sadd.s32 %s49, 1
      %p53 = scmp.eq.s32.totalorder %s15, 1
      %p54 = scmp.ne.s32.totalorder %s49, %s51
      %p55 = scmp.eq.s32.totalorder %s15, 0
      %p56 = por %p54, %p55
      %p57 = scmp.ne.s32.totalorder %s49, %s51
      %p58 = scmp.eq.s32.totalorder %s20, 1
      %p59 = por %p57, %p58
      %p60 = scmp.ne.s32.totalorder %s51, %s52
      %p61 = scmp.eq.s32.totalorder %s20, 0
      %p62 = por %p60, %p61
      %p63 = scmp.ne.s32.totalorder %s51, %s52
      %p64 = scmp.eq.s32.totalorder %s21, 1
      %p65 = por %p63, %p64
      %p67 = scmp.ne.s32.totalorder %s52, %s66
      %p68 = scmp.eq.s32.totalorder %s21, 0
      %p69 = por %p67, %p68
      %s71 = sadd.s32 %s70, 1
      %p74 = scmp.eq.s32.totalorder %s15, 1
      %p75 = scmp.ne.s32.totalorder %s70, %s72
      %p76 = scmp.eq.s32.totalorder %s15, 0
      %p77 = por %p75, %p76
      %p78 = scmp.ne.s32.totalorder %s70, %s72
      %p79 = scmp.eq.s32.totalorder %s20, 1
      %p80 = por %p78, %p79
      %p81 = scmp.ne.s32.totalorder %s72, %s73
      %p82 = scmp.eq.s32.totalorder %s20, 0
      %p83 = por %p81, %p82
      %p84 = scmp.ne.s32.totalorder %s72, %s73
      %p85 = scmp.eq.s32.totalorder %s21, 1
      %p86 = por %p84, %p85
      %p88 = scmp.ne.s32.totalorder %s73, %s87
      %p89 = scmp.eq.s32.totalorder %s21, 0
      %p90 = por %p88, %p89
      %s92 = sadd.s32 %s91, 1
      %p95 = scmp.eq.s32.totalorder %s15, 1
      %p96 = scmp.ne.s32.totalorder %s91, %s93
      %p97 = scmp.eq.s32.totalorder %s15, 0
      %p98 = por %p96, %p97
      %p99 = scmp.ne.s32.totalorder %s91, %s93
      %p100 = scmp.eq.s32.totalorder %s20, 1
      %p101 = por %p99, %p100
      %p102 = scmp.ne.s32.totalorder %s93, %s94
      %p103 = scmp.eq.s32.totalorder %s20, 0
      %p104 = por %p102, %p103
      %p105 = scmp.ne.s32.totalorder %s93, %s94
      %p106 = scmp.eq.s32.totalorder %s21, 1
      %p107 = por %p105, %p106
      %p109 = scmp.ne.s32.totalorder %s94, %s108
      %p110 = scmp.eq.s32.totalorder %s21, 0
      %p111 = por %p109, %p110
      %s113 = sadd.s32 %s112, 1
      %p116 = scmp.eq.s32.totalorder %s15, 1
      %p117 = scmp.ne.s32.totalorder %s112, %s114
      %p118 = scmp.eq.s32.totalorder %s15, 0
      %p119 = por %p117, %p118
      %p120 = scmp.ne.s32.totalorder %s112, %s114
      %p121 = scmp.eq.s32.totalorder %s20, 1
      %p122 = por %p120, %p121
      %p123 = scmp.ne.s32.totalorder %s114, %s115
      %p124 = scmp.eq.s32.totalorder %s20, 0
      %p125 = por %p123, %p124
      %p126 = scmp.ne.s32.totalorder %s114, %s115
      %p127 = scmp.eq.s32.totalorder %s21, 1
      %p128 = por %p126, %p127
      %p130 = scmp.ne.s32.totalorder %s115, %s129
      %p131 = scmp.eq.s32.totalorder %s21, 0
      %p132 = por %p130, %p131
      %s134 = sadd.s32 %s133, 1
      %p137 = scmp.eq.s32.totalorder %s15, 1
      %p138 = scmp.ne.s32.totalorder %s133, %s135
      %p139 = scmp.eq.s32.totalorder %s15, 0
      %p140 = por %p138, %p139
      %p141 = scmp.ne.s32.totalorder %s133, %s135
      %p142 = scmp.eq.s32.totalorder %s20, 1
      %p143 = por %p141, %p142
      %p144 = scmp.ne.s32.totalorder %s135, %s136
      %p145 = scmp.eq.s32.totalorder %s20, 0
      %p146 = por %p144, %p145
      %p147 = scmp.ne.s32.totalorder %s135, %s136
      %p148 = scmp.eq.s32.totalorder %s21, 1
      %p149 = por %p147, %p148
      %p151 = scmp.ne.s32.totalorder %s136, %s150
      %p152 = scmp.eq.s32.totalorder %s21, 0
      %p153 = por %p151, %p152
      %s154 = ssub.s32 %s15, %s22
      %p155 = scmp.eq.s32.totalorder %s154, 0
      %s157 = sadd.s32 %s156, 1
      %s158 = scalar_select %p155, %s156, %s157
      %p161 = pneg %p155
      %p162 = scmp.eq.s32.totalorder %s15, 1
      %p163 = por %p161, %p162
      %p164 = scmp.ne.s32.totalorder %s156, %s159
      %p165 = scmp.eq.s32.totalorder %s15, 0
      %p166 = por %p164, %p165
      %p167 = scmp.ne.s32.totalorder %s156, %s159
      %p168 = scmp.eq.s32.totalorder %s20, 1
      %p169 = por %p167, %p168
      %p170 = scmp.ne.s32.totalorder %s159, %s160
      %p171 = scmp.eq.s32.totalorder %s20, 0
      %p172 = por %p170, %p171
      %p173 = scmp.ne.s32.totalorder %s159, %s160
      %p174 = scmp.eq.s32.totalorder %s21, 1
      %p175 = por %p173, %p174
      %p177 = scmp.ne.s32.totalorder %s160, %s176
      %p178 = scmp.eq.s32.totalorder %s21, 0
      %p179 = por %p177, %p178
      %p180 = scmp.le.s32.totalorder 1, %s15
      %p181 = scmp.lt.s32.totalorder %s15, 3
      %p182 = pnand %p180, %p181
      %p183 = pneg %p182
      // Predicated region
      $region9: #{tpu_custom_call.1} parent=5 // pred_check
        _
      $region10: #{tpu_custom_call.1} parent=5 // pred_check_branch
        %185 = sbr.rel (%p182) target = $region12
      $region11: #{tpu_custom_call.1} parent=5 // pred_region
        %s186 = ssub.s32 %s15, 1
        // Predicated region
        $region13: #{tpu_custom_call.1} parent=11 // pred_check
          %p187 = pneg %p62
        $region14: #{tpu_custom_call.1} parent=11 // pred_check_branch
          %189 = sbr.rel (%p187) target = $region16
        $region15: #{tpu_custom_call.1} parent=11 // pred_region
          _
        $region16: #{tpu_custom_call.1} parent=11 // pred_fallthru
          _
        // Predicated region
        $region17: #{tpu_custom_call.1} parent=11 // pred_check
          %p190 = pneg %p83
        $region18: #{tpu_custom_call.1} parent=11 // pred_check_branch
          %192 = sbr.rel (%p190) target = $region20
        $region19: #{tpu_custom_call.1} parent=11 // pred_region
          %s194 = ssub.s32 10240, 10240
          %195 = vsyncadd [#allocation4], %s194
          %s196 = sshll.u32 [#allocation3], 4
          %s197 = int_to_ptr.vmem [resolvable:$true] %s196
          %202 = dma.hbm_to_vmem [thread:$0]  %s2, 10240, %s197, [#allocation4], 128, 128, 8
        $region20: #{tpu_custom_call.1} parent=11 // pred_fallthru
          _
        // Predicated region
        $region21: #{tpu_custom_call.1} parent=11 // pred_check
          %p203 = pneg %p104
        $region22: #{tpu_custom_call.1} parent=11 // pred_check_branch
          %205 = sbr.rel (%p203) target = $region24
        $region23: #{tpu_custom_call.1} parent=11 // pred_region
          _
        $region24: #{tpu_custom_call.1} parent=11 // pred_fallthru
          _
        // Predicated region
        $region25: #{tpu_custom_call.1} parent=11 // pred_check
          %p206 = pneg %p125
        $region26: #{tpu_custom_call.1} parent=11 // pred_check_branch
          %208 = sbr.rel (%p206) target = $region28
        $region27: #{tpu_custom_call.1} parent=11 // pred_region
          _
        $region28: #{tpu_custom_call.1} parent=11 // pred_fallthru
          _
        // Predicated region
        $region29: #{tpu_custom_call.1} parent=11 // pred_check
          %p209 = pneg %p146
        $region30: #{tpu_custom_call.1} parent=11 // pred_check_branch
          %211 = sbr.rel (%p209) target = $region32
        $region31: #{tpu_custom_call.1} parent=11 // pred_region
          _
        $region32: #{tpu_custom_call.1} parent=11 // pred_fallthru
          _
      $region12: #{tpu_custom_call.1} parent=5 // pred_fallthru
        _
      %p212 = scmp.lt.s32.totalorder %s15, 2
      // Predicated region
      $region33: #{tpu_custom_call.1} parent=5 // pred_check
        %p213 = pneg %p212
      $region34: #{tpu_custom_call.1} parent=5 // pred_check_branch
        %215 = sbr.rel (%p213) target = $region36
      $region35: #{tpu_custom_call.1} parent=5 // pred_region
        // Predicated region
        $region37: #{tpu_custom_call.1} parent=35 // pred_check
          %p216 = pneg %p35
        $region38: #{tpu_custom_call.1} parent=35 // pred_check_branch
          %218 = sbr.rel (%p216) target = $region40
        $region39: #{tpu_custom_call.1} parent=35 // pred_region
          %s219 = smul.u32 16, %s15
          %p220 = scmp.lt.s32.totalorder %s219, 31
          %s221 = scalar_select %p220, %s219, 31
          %s222 = smul.addr %s221, 8
          %s223 = scalar_lea.vmem %s0, %s222
          %s224 = smul.u32 16, %s15
        $region40: #{tpu_custom_call.1} parent=35 // pred_fallthru
          _
      $region36: #{tpu_custom_call.1} parent=5 // pred_fallthru
        _
      %p225 = scmp.le.s32.totalorder 1, %s15
      %p226 = scmp.lt.s32.totalorder %s15, 3
      %p227 = pnand %p225, %p226
      %p228 = pneg %p227
      // Predicated region
      $region41: #{tpu_custom_call.1} parent=5 // pred_check
        _
      $region42: #{tpu_custom_call.1} parent=5 // pred_check_branch
        %230 = sbr.rel (%p227) target = $region44
      $region43: #{tpu_custom_call.1} parent=5 // pred_region
        %s231 = ssub.s32 %s15, 1
        // Predicated region
        $region45: #{tpu_custom_call.1} parent=43 // pred_check
          %p232 = pneg %p83
        $region46: #{tpu_custom_call.1} parent=43 // pred_check_branch
          %234 = sbr.rel (%p232) target = $region48
        $region47: #{tpu_custom_call.1} parent=43 // pred_region
          %235 = dma.done [#allocation4], 10240
        $region48: #{tpu_custom_call.1} parent=43 // pred_fallthru
          _
        %s236 = smul.u32 16, %s20
        %p237 = scmp.lt.s32.totalorder %s236, 31
        %s238 = scalar_select %p237, %s236, 31
        %s239 = smul.addr %s238, 8
        %s240 = scalar_lea.vmem %s0, %s239
        %p241 = pneg %p41
        %p242 = pneg %p38
        %p243 = pneg %p62
        %p244 = pneg %p59
        %p245 = pneg %p83
        %p246 = pneg %p80
        %p247 = pneg %p104
        %p248 = pneg %p101
        %p249 = pneg %p125
        %p250 = pneg %p122
        %p251 = pneg %p146
        %p252 = pneg %p143
        %p253 = pneg %p172
        %p254 = pneg %p169
        %s255 = smul.u32 16, %s20
        %p256 = scmp.lt.s32.totalorder %s255, 31
        %s257 = scalar_select %p256, %s255, 31
        %s258 = smul.addr %s257, 8
        %s259 = scalar_lea.vmem %s6, %s258
        %s260 = smul.u32 16, %s20
        %p261 = scmp.lt.s32.totalorder %s260, 31
        %s262 = scalar_select %p261, %s260, 31
        %s263 = smul.addr %s262, 8
        %s264 = scalar_lea.vmem %s0, %s263
        %s265 = smul.u32 16, %s20
        %s266 = smul.u32 16, %s20
        %p267 = scmp.lt.s32.totalorder %s266, 31
        %s268 = scalar_select %p267, %s266, 31
        %s269 = smul.addr %s268, 8
        %s270 = scalar_lea.vmem %s6, %s269
        %s271 = smul.u32 16, %s20
        %v272 = vld [vmem:[%s264] sm:$0xff]
        %v273 = vld [vmem:[%s264 + $0x8] sm:$0xff]
        %v274 = vld [vmem:[%s264 + $0x10] sm:$0xff]
        %v275 = vld [vmem:[%s264 + $0x18] sm:$0xff]
        %v276 = vld [vmem:[%s264 + $0x20] sm:$0xff]
        %v277 = vld [vmem:[%s264 + $0x28] sm:$0xff]
        %v278 = vld [vmem:[%s264 + $0x30] sm:$0xff]
        %v279 = vld [vmem:[%s264 + $0x38] sm:$0xff]
        %v280 = vld [vmem:[%s264 + $0x40] sm:$0xff]
        %v281 = vld [vmem:[%s264 + $0x48] sm:$0xff]
        %v282 = vld [vmem:[%s264 + $0x50] sm:$0xff]
        %v283 = vld [vmem:[%s264 + $0x58] sm:$0xff]
        %v284 = vld [vmem:[%s264 + $0x60] sm:$0xff]
        %v285 = vld [vmem:[%s264 + $0x68] sm:$0xff]
        %v286 = vld [vmem:[%s264 + $0x70] sm:$0xff]
        %v287 = vld [vmem:[%s264 + $0x78] sm:$0xff]
        %v288 = vld [vmem:[%s1] sm:$0x3]
        %290 = vset.pattern.permute.xlu0 0
        %291 = vperm.xlu0 %290, %v272
        %v292 = vpop.permute.xlu0 %291
        %295 = vset.pattern.permute.xlu0 0
        %296 = vperm.xlu0 %295, %v273
        %v297 = vpop.permute.xlu0 %296
        %300 = vset.pattern.permute.xlu0 0
        %301 = vperm.xlu0 %300, %v274
        %v302 = vpop.permute.xlu0 %301
        %305 = vset.pattern.permute.xlu0 0
        %306 = vperm.xlu0 %305, %v275
        %v307 = vpop.permute.xlu0 %306
        %310 = vset.pattern.permute.xlu0 0
        %311 = vperm.xlu0 %310, %v276
        %v312 = vpop.permute.xlu0 %311
        %315 = vset.pattern.permute.xlu0 0
        %316 = vperm.xlu0 %315, %v277
        %v317 = vpop.permute.xlu0 %316
        %320 = vset.pattern.permute.xlu0 0
        %321 = vperm.xlu0 %320, %v278
        %v322 = vpop.permute.xlu0 %321
        %325 = vset.pattern.permute.xlu0 0
        %326 = vperm.xlu0 %325, %v279
        %v327 = vpop.permute.xlu0 %326
        %330 = vset.pattern.permute.xlu0 0
        %331 = vperm.xlu0 %330, %v280
        %v332 = vpop.permute.xlu0 %331
        %335 = vset.pattern.permute.xlu0 0
        %336 = vperm.xlu0 %335, %v281
        %v337 = vpop.permute.xlu0 %336
        %340 = vset.pattern.permute.xlu0 0
        %341 = vperm.xlu0 %340, %v282
        %v342 = vpop.permute.xlu0 %341
        %345 = vset.pattern.permute.xlu0 0
        %346 = vperm.xlu0 %345, %v283
        %v347 = vpop.permute.xlu0 %346
        %350 = vset.pattern.permute.xlu0 0
        %351 = vperm.xlu0 %350, %v284
        %v352 = vpop.permute.xlu0 %351
        %355 = vset.pattern.permute.xlu0 0
        %356 = vperm.xlu0 %355, %v285
        %v357 = vpop.permute.xlu0 %356
        %360 = vset.pattern.permute.xlu0 0
        %361 = vperm.xlu0 %360, %v286
        %v362 = vpop.permute.xlu0 %361
        %365 = vset.pattern.permute.xlu0 0
        %366 = vperm.xlu0 %365, %v287
        %v367 = vpop.permute.xlu0 %366
        %v369 = vlaneseq
        %v370 = vshrl.u32 %v369, 7
        %v371 = vsub.s32 0, %v370
        %v372 = vrot.slane %v288, %v371
        %v373 = vmul.f32 %v292, %v372
        %v374 = vmul.f32 %v297, %v372
        %v375 = vmul.f32 %v302, %v372
        %v376 = vmul.f32 %v307, %v372
        %v377 = vmul.f32 %v312, %v372
        %v378 = vmul.f32 %v317, %v372
        %v379 = vmul.f32 %v322, %v372
        %v380 = vmul.f32 %v327, %v372
        %v381 = vmul.f32 %v332, %v372
        %v382 = vmul.f32 %v337, %v372
        %v383 = vmul.f32 %v342, %v372
        %v384 = vmul.f32 %v347, %v372
        %v385 = vmul.f32 %v352, %v372
        %v386 = vmul.f32 %v357, %v372
        %v387 = vmul.f32 %v362, %v372
        %v388 = vmul.f32 %v367, %v372
        %389 = vset.pattern.permute.xlu0 1
        %390 = vperm.xlu0 %389, %v272
        %v391 = vpop.permute.xlu0 %390
        %393 = vset.pattern.permute.xlu0 1
        %394 = vperm.xlu0 %393, %v273
        %v395 = vpop.permute.xlu0 %394
        %397 = vset.pattern.permute.xlu0 1
        %398 = vperm.xlu0 %397, %v274
        %v399 = vpop.permute.xlu0 %398
        %401 = vset.pattern.permute.xlu0 1
        %402 = vperm.xlu0 %401, %v275
        %v403 = vpop.permute.xlu0 %402
        %405 = vset.pattern.permute.xlu0 1
        %406 = vperm.xlu0 %405, %v276
        %v407 = vpop.permute.xlu0 %406
        %409 = vset.pattern.permute.xlu0 1
        %410 = vperm.xlu0 %409, %v277
        %v411 = vpop.permute.xlu0 %410
        %413 = vset.pattern.permute.xlu0 1
        %414 = vperm.xlu0 %413, %v278
        %v415 = vpop.permute.xlu0 %414
        %417 = vset.pattern.permute.xlu0 1
        %418 = vperm.xlu0 %417, %v279
        %v419 = vpop.permute.xlu0 %418
        %421 = vset.pattern.permute.xlu0 1
        %422 = vperm.xlu0 %421, %v280
        %v423 = vpop.permute.xlu0 %422
        %425 = vset.pattern.permute.xlu0 1
        %426 = vperm.xlu0 %425, %v281
        %v427 = vpop.permute.xlu0 %426
        %429 = vset.pattern.permute.xlu0 1
        %430 = vperm.xlu0 %429, %v282
        %v431 = vpop.permute.xlu0 %430
        %433 = vset.pattern.permute.xlu0 1
        %434 = vperm.xlu0 %433, %v283
        %v435 = vpop.permute.xlu0 %434
        %437 = vset.pattern.permute.xlu0 1
        %438 = vperm.xlu0 %437, %v284
        %v439 = vpop.permute.xlu0 %438
        %441 = vset.pattern.permute.xlu0 1
        %442 = vperm.xlu0 %441, %v285
        %v443 = vpop.permute.xlu0 %442
        %445 = vset.pattern.permute.xlu0 1
        %446 = vperm.xlu0 %445, %v286
        %v447 = vpop.permute.xlu0 %446
        %449 = vset.pattern.permute.xlu0 1
        %450 = vperm.xlu0 %449, %v287
        %v451 = vpop.permute.xlu0 %450
        %v453 = vlaneseq
        %v454 = vshrl.u32 %v453, 7
        %v455 = vsub.s32 1, %v454
        %v456 = vrot.slane %v288, %v455
        %v457 = vmul.f32 %v391, %v456
        %v458 = vmul.f32 %v395, %v456
        %v459 = vmul.f32 %v399, %v456
        %v460 = vmul.f32 %v403, %v456
        %v461 = vmul.f32 %v407, %v456
        %v462 = vmul.f32 %v411, %v456
        %v463 = vmul.f32 %v415, %v456
        %v464 = vmul.f32 %v419, %v456
        %v465 = vmul.f32 %v423, %v456
        %v466 = vmul.f32 %v427, %v456
        %v467 = vmul.f32 %v431, %v456
        %v468 = vmul.f32 %v435, %v456
        %v469 = vmul.f32 %v439, %v456
        %v470 = vmul.f32 %v443, %v456
        %v471 = vmul.f32 %v447, %v456
        %v472 = vmul.f32 %v451, %v456
        %v473 = vadd.f32 %v373, %v457
        %v474 = vadd.f32 %v374, %v458
        %v475 = vadd.f32 %v375, %v459
        %v476 = vadd.f32 %v376, %v460
        %v477 = vadd.f32 %v377, %v461
        %v478 = vadd.f32 %v378, %v462
        %v479 = vadd.f32 %v379, %v463
        %v480 = vadd.f32 %v380, %v464
        %v481 = vadd.f32 %v381, %v465
        %v482 = vadd.f32 %v382, %v466
        %v483 = vadd.f32 %v383, %v467
        %v484 = vadd.f32 %v384, %v468
        %v485 = vadd.f32 %v385, %v469
        %v486 = vadd.f32 %v386, %v470
        %v487 = vadd.f32 %v387, %v471
        %v488 = vadd.f32 %v388, %v472
        %v489 = vld [vmem:[%s4] sm:$0x1]
        %v490 = vlaneseq
        %v491 = vshrl.u32 %v490, 7
        %v492 = vsub.s32 0, %v491
        %v493 = vrot.slane %v489, %v492
        %v494 = vadd.f32 %v473, %v493
        %v495 = vadd.f32 %v474, %v493
        %v496 = vadd.f32 %v475, %v493
        %v497 = vadd.f32 %v476, %v493
        %v498 = vadd.f32 %v477, %v493
        %v499 = vadd.f32 %v478, %v493
        %v500 = vadd.f32 %v479, %v493
        %v501 = vadd.f32 %v480, %v493
        %v502 = vadd.f32 %v481, %v493
        %v503 = vadd.f32 %v482, %v493
        %v504 = vadd.f32 %v483, %v493
        %v505 = vadd.f32 %v484, %v493
        %v506 = vadd.f32 %v485, %v493
        %v507 = vadd.f32 %v486, %v493
        %v508 = vadd.f32 %v487, %v493
        %v509 = vadd.f32 %v488, %v493
        %v510 = vtanh.pop %v494
        %v511 = vtanh.pop %v495
        %v512 = vtanh.pop %v496
        %v513 = vtanh.pop %v497
        %v514 = vtanh.pop %v498
        %v515 = vtanh.pop %v499
        %v516 = vtanh.pop %v500
        %v517 = vtanh.pop %v501
        %v518 = vtanh.pop %v502
        %v519 = vtanh.pop %v503
        %v520 = vtanh.pop %v504
        %v521 = vtanh.pop %v505
        %v522 = vtanh.pop %v506
        %v523 = vtanh.pop %v507
        %v524 = vtanh.pop %v508
        %v525 = vtanh.pop %v509
        %v526 = vld [vmem:[#allocation3] sm:$0xff]
        %v527 = vld [vmem:[#allocation3 + $0x8] sm:$0xff]
        %v528 = vld [vmem:[#allocation3 + $0x10] sm:$0xff]
        %v529 = vld [vmem:[#allocation3 + $0x18] sm:$0xff]
        %v530 = vld [vmem:[#allocation3 + $0x20] sm:$0xff]
        %v531 = vld [vmem:[#allocation3 + $0x28] sm:$0xff]
        %v532 = vld [vmem:[#allocation3 + $0x30] sm:$0xff]
        %v533 = vld [vmem:[#allocation3 + $0x38] sm:$0xff]
        %v534 = vld [vmem:[#allocation3 + $0x40] sm:$0xff]
        %v535 = vld [vmem:[#allocation3 + $0x48] sm:$0xff]
        %v536 = vld [vmem:[#allocation3 + $0x50] sm:$0xff]
        %v537 = vld [vmem:[#allocation3 + $0x58] sm:$0xff]
        %v538 = vld [vmem:[#allocation3 + $0x60] sm:$0xff]
        %v539 = vld [vmem:[#allocation3 + $0x68] sm:$0xff]
        %v540 = vld [vmem:[#allocation3 + $0x70] sm:$0xff]
        %v541 = vld [vmem:[#allocation3 + $0x78] sm:$0xff]
        %v542 = vld [vmem:[%s4 + $0x1] sm:$0x1]
        %v543 = vlaneseq
        %v544 = vshrl.u32 %v543, 7
        %v545 = vsub.s32 0, %v544
        %v546 = vrot.slane %v542, %v545
        %547 = vmatprep.subr.mxu0 0.0
        %548 = vmatpush1.msra.mxu0 %v526
        %549 = vmatprep.subr.mxu0 0.0
        %550 = vmatpush1.msra.mxu0 %v527
        %551 = vmatprep.subr.mxu0 0.0
        %552 = vmatpush1.msra.mxu0 %v528
        %553 = vmatprep.subr.mxu0 0.0
        %554 = vmatpush1.msra.mxu0 %v529
        %555 = vmatprep.subr.mxu0 0.0
        %556 = vmatpush1.msra.mxu0 %v530
        %557 = vmatprep.subr.mxu0 0.0
        %558 = vmatpush1.msra.mxu0 %v531
        %559 = vmatprep.subr.mxu0 0.0
        %560 = vmatpush1.msra.mxu0 %v532
        %561 = vmatprep.subr.mxu0 0.0
        %562 = vmatpush1.msra.mxu0 %v533
        %563 = vmatprep.subr.mxu0 0.0
        %564 = vmatpush1.msra.mxu0 %v534
        %565 = vmatprep.subr.mxu0 0.0
        %566 = vmatpush1.msra.mxu0 %v535
        %567 = vmatprep.subr.mxu0 0.0
        %568 = vmatpush1.msra.mxu0 %v536
        %569 = vmatprep.subr.mxu0 0.0
        %570 = vmatpush1.msra.mxu0 %v537
        %571 = vmatprep.subr.mxu0 0.0
        %572 = vmatpush1.msra.mxu0 %v538
        %573 = vmatprep.subr.mxu0 0.0
        %574 = vmatpush1.msra.mxu0 %v539
        %575 = vmatprep.subr.mxu0 0.0
        %576 = vmatpush1.msra.mxu0 %v540
        %577 = vmatprep.subr.mxu0 0.0
        %578 = vmatpush1.msra.mxu0 %v541
        %579 = vmatprep.subr.mxu0 0.0
        %580 = vmatpush1.msra.mxu0 0.0
        %581 = vmatprep.subr.mxu0 0.0
        %582 = vmatpush1.msra.mxu0 0.0
        %583 = vmatprep.subr.mxu0 0.0
        %584 = vmatpush1.msra.mxu0 0.0
        %585 = vmatprep.subr.mxu0 0.0
        %586 = vmatpush1.msra.mxu0 0.0
        %587 = vmatprep.subr.mxu0 0.0
        %588 = vmatpush1.msra.mxu0 0.0
        %589 = vmatprep.subr.mxu0 0.0
        %590 = vmatpush1.msra.mxu0 0.0
        %591 = vmatprep.subr.mxu0 0.0
        %592 = vmatpush1.msra.mxu0 0.0
        %593 = vmatprep.subr.mxu0 0.0
        %594 = vmatpush1.msra.mxu0 0.0
        %595 = vmatprep.subr.mxu0 0.0
        %596 = vmatpush1.msra.mxu0 0.0
        %597 = vmatprep.subr.mxu0 0.0
        %598 = vmatpush1.msra.mxu0 0.0
        %599 = vmatprep.subr.mxu0 0.0
        %600 = vmatpush1.msra.mxu0 0.0
        %601 = vmatprep.subr.mxu0 0.0
        %602 = vmatpush1.msra.mxu0 0.0
        %603 = vmatprep.subr.mxu0 0.0
        %604 = vmatpush1.msra.mxu0 0.0
        %605 = vmatprep.subr.mxu0 0.0
        %606 = vmatpush1.msra.mxu0 0.0
        %607 = vmatprep.subr.mxu0 0.0
        %608 = vmatpush1.msra.mxu0 0.0
        %609 = vmatprep.subr.mxu0 0.0
        %610 = vmatpush1.msra.mxu0 0.0
        %611 = vmatprep.mubr.f32.mxu0 0.0
        %612 = vmatmul.mubr.f32.gmra.mrb[0].mxu0 %v510
        %v613 = vpop.f32.mrb[0].mxu0
        %v614 = vadd.f32 %v546, %v613
        %v615 = vpop.f32.mrb[0].mxu0
        %616 = vmatprep.mubr.f32.mxu0 0.0
        %617 = vmatmul.mubr.f32.gmra.mrb[0].mxu0 %v511
        %v618 = vpop.f32.mrb[0].mxu0
        %v619 = vadd.f32 %v546, %v618
        %v620 = vpop.f32.mrb[0].mxu0
        %621 = vmatprep.mubr.f32.mxu0 0.0
        %622 = vmatmul.mubr.f32.gmra.mrb[0].mxu0 %v512
        %v623 = vpop.f32.mrb[0].mxu0
        %v624 = vadd.f32 %v546, %v623
        %v625 = vpop.f32.mrb[0].mxu0
        %626 = vmatprep.mubr.f32.mxu0 0.0
        %627 = vmatmul.mubr.f32.gmra.mrb[0].mxu0 %v513
        %v628 = vpop.f32.mrb[0].mxu0
        %v629 = vadd.f32 %v546, %v628
        %v630 = vpop.f32.mrb[0].mxu0
        %631 = vmatprep.mubr.f32.mxu0 0.0
        %632 = vmatmul.mubr.f32.gmra.mrb[0].mxu0 %v514
        %v633 = vpop.f32.mrb[0].mxu0
        %v634 = vadd.f32 %v546, %v633
        %v635 = vpop.f32.mrb[0].mxu0
        %636 = vmatprep.mubr.f32.mxu0 0.0
        %637 = vmatmul.mubr.f32.gmra.mrb[0].mxu0 %v515
        %v638 = vpop.f32.mrb[0].mxu0
        %v639 = vadd.f32 %v546, %v638
        %v640 = vpop.f32.mrb[0].mxu0
        %641 = vmatprep.mubr.f32.mxu0 0.0
        %642 = vmatmul.mubr.f32.gmra.mrb[0].mxu0 %v516
        %v643 = vpop.f32.mrb[0].mxu0
        %v644 = vadd.f32 %v546, %v643
        %v645 = vpop.f32.mrb[0].mxu0
        %646 = vmatprep.mubr.f32.mxu0 0.0
        %647 = vmatmul.mubr.f32.gmra.mrb[0].mxu0 %v517
        %v648 = vpop.f32.mrb[0].mxu0
        %v649 = vadd.f32 %v546, %v648
        %v650 = vpop.f32.mrb[0].mxu0
        %651 = vmatprep.mubr.f32.mxu0 0.0
        %652 = vmatmul.mubr.f32.gmra.mrb[0].mxu0 %v518
        %v653 = vpop.f32.mrb[0].mxu0
        %v654 = vadd.f32 %v546, %v653
        %v655 = vpop.f32.mrb[0].mxu0
        %656 = vmatprep.mubr.f32.mxu0 0.0
        %657 = vmatmul.mubr.f32.gmra.mrb[0].mxu0 %v519
        %v658 = vpop.f32.mrb[0].mxu0
        %v659 = vadd.f32 %v546, %v658
        %v660 = vpop.f32.mrb[0].mxu0
        %661 = vmatprep.mubr.f32.mxu0 0.0
        %662 = vmatmul.mubr.f32.gmra.mrb[0].mxu0 %v520
        %v663 = vpop.f32.mrb[0].mxu0
        %v664 = vadd.f32 %v546, %v663
        %v665 = vpop.f32.mrb[0].mxu0
        %666 = vmatprep.mubr.f32.mxu0 0.0
        %667 = vmatmul.mubr.f32.gmra.mrb[0].mxu0 %v521
        %v668 = vpop.f32.mrb[0].mxu0
        %v669 = vadd.f32 %v546, %v668
        %v670 = vpop.f32.mrb[0].mxu0
        %671 = vmatprep.mubr.f32.mxu0 0.0
        %672 = vmatmul.mubr.f32.gmra.mrb[0].mxu0 %v522
        %v673 = vpop.f32.mrb[0].mxu0
        %v674 = vadd.f32 %v546, %v673
        %v675 = vpop.f32.mrb[0].mxu0
        %676 = vmatprep.mubr.f32.mxu0 0.0
        %677 = vmatmul.mubr.f32.gmra.mrb[0].mxu0 %v523
        %v678 = vpop.f32.mrb[0].mxu0
        %v679 = vadd.f32 %v546, %v678
        %v680 = vpop.f32.mrb[0].mxu0
        %681 = vmatprep.mubr.f32.mxu0 0.0
        %682 = vmatmul.mubr.f32.gmra.mrb[0].mxu0 %v524
        %v683 = vpop.f32.mrb[0].mxu0
        %v684 = vadd.f32 %v546, %v683
        %v685 = vpop.f32.mrb[0].mxu0
        %686 = vmatprep.mubr.f32.mxu0 0.0
        %687 = vmatmul.mubr.f32.gmra.mrb[0].mxu0 %v525
        %v688 = vpop.f32.mrb[0].mxu0
        %v689 = vadd.f32 %v546, %v688
        %v690 = vpop.f32.mrb[0].mxu0
        %691 = vdwg.mxu0
        %v692 = vtanh.pop %v614
        %v693 = vtanh.pop %v619
        %v694 = vtanh.pop %v624
        %v695 = vtanh.pop %v629
        %v696 = vtanh.pop %v634
        %v697 = vtanh.pop %v639
        %v698 = vtanh.pop %v644
        %v699 = vtanh.pop %v649
        %v700 = vtanh.pop %v654
        %v701 = vtanh.pop %v659
        %v702 = vtanh.pop %v664
        %v703 = vtanh.pop %v669
        %v704 = vtanh.pop %v674
        %v705 = vtanh.pop %v679
        %v706 = vtanh.pop %v684
        %v707 = vtanh.pop %v689
        %s708 = scalar_lea.vmem [#allocation3], 128
        %v709 = vld [vmem:[%s708] sm:$0xff]
        %v710 = vld [vmem:[%s708 + $0x8] sm:$0xff]
        %v711 = vld [vmem:[%s708 + $0x10] sm:$0xff]
        %v712 = vld [vmem:[%s708 + $0x18] sm:$0xff]
        %v713 = vld [vmem:[%s708 + $0x20] sm:$0xff]
        %v714 = vld [vmem:[%s708 + $0x28] sm:$0xff]
        %v715 = vld [vmem:[%s708 + $0x30] sm:$0xff]
        %v716 = vld [vmem:[%s708 + $0x38] sm:$0xff]
        %v717 = vld [vmem:[%s708 + $0x40] sm:$0xff]
        %v718 = vld [vmem:[%s708 + $0x48] sm:$0xff]
        %v719 = vld [vmem:[%s708 + $0x50] sm:$0xff]
        %v720 = vld [vmem:[%s708 + $0x58] sm:$0xff]
        %v721 = vld [vmem:[%s708 + $0x60] sm:$0xff]
        %v722 = vld [vmem:[%s708 + $0x68] sm:$0xff]
        %v723 = vld [vmem:[%s708 + $0x70] sm:$0xff]
        %v724 = vld [vmem:[%s708 + $0x78] sm:$0xff]
        %v725 = vld [vmem:[%s4 + $0x2] sm:$0x1]
        %v726 = vlaneseq
        %v727 = vshrl.u32 %v726, 7
        %v728 = vsub.s32 0, %v727
        %v729 = vrot.slane %v725, %v728
        %730 = vmatprep.subr.mxu0 0.0
        %731 = vmatpush1.msra.mxu0 %v709
        %732 = vmatprep.subr.mxu0 0.0
        %733 = vmatpush1.msra.mxu0 %v710
        %734 = vmatprep.subr.mxu0 0.0
        %735 = vmatpush1.msra.mxu0 %v711
        %736 = vmatprep.subr.mxu0 0.0
        %737 = vmatpush1.msra.mxu0 %v712
        %738 = vmatprep.subr.mxu0 0.0
        %739 = vmatpush1.msra.mxu0 %v713
        %740 = vmatprep.subr.mxu0 0.0
        %741 = vmatpush1.msra.mxu0 %v714
        %742 = vmatprep.subr.mxu0 0.0
        %743 = vmatpush1.msra.mxu0 %v715
        %744 = vmatprep.subr.mxu0 0.0
        %745 = vmatpush1.msra.mxu0 %v716
        %746 = vmatprep.subr.mxu0 0.0
        %747 = vmatpush1.msra.mxu0 %v717
        %748 = vmatprep.subr.mxu0 0.0
        %749 = vmatpush1.msra.mxu0 %v718
        %750 = vmatprep.subr.mxu0 0.0
        %751 = vmatpush1.msra.mxu0 %v719
        %752 = vmatprep.subr.mxu0 0.0
        %753 = vmatpush1.msra.mxu0 %v720
        %754 = vmatprep.subr.mxu0 0.0
        %755 = vmatpush1.msra.mxu0 %v721
        %756 = vmatprep.subr.mxu0 0.0
        %757 = vmatpush1.msra.mxu0 %v722
        %758 = vmatprep.subr.mxu0 0.0
        %759 = vmatpush1.msra.mxu0 %v723
        %760 = vmatprep.subr.mxu0 0.0
        %761 = vmatpush1.msra.mxu0 %v724
        %762 = vmatprep.subr.mxu0 0.0
        %763 = vmatpush1.msra.mxu0 0.0
        %764 = vmatprep.subr.mxu0 0.0
        %765 = vmatpush1.msra.mxu0 0.0
        %766 = vmatprep.subr.mxu0 0.0
        %767 = vmatpush1.msra.mxu0 0.0
        %768 = vmatprep.subr.mxu0 0.0
        %769 = vmatpush1.msra.mxu0 0.0
        %770 = vmatprep.subr.mxu0 0.0
        %771 = vmatpush1.msra.mxu0 0.0
        %772 = vmatprep.subr.mxu0 0.0
        %773 = vmatpush1.msra.mxu0 0.0
        %774 = vmatprep.subr.mxu0 0.0
        %775 = vmatpush1.msra.mxu0 0.0
        %776 = vmatprep.subr.mxu0 0.0
        %777 = vmatpush1.msra.mxu0 0.0
        %778 = vmatprep.subr.mxu0 0.0
        %779 = vmatpush1.msra.mxu0 0.0
        %780 = vmatprep.subr.mxu0 0.0
        %781 = vmatpush1.msra.mxu0 0.0
        %782 = vmatprep.subr.mxu0 0.0
        %783 = vmatpush1.msra.mxu0 0.0
        %784 = vmatprep.subr.mxu0 0.0
        %785 = vmatpush1.msra.mxu0 0.0
        %786 = vmatprep.subr.mxu0 0.0
        %787 = vmatpush1.msra.mxu0 0.0
        %788 = vmatprep.subr.mxu0 0.0
        %789 = vmatpush1.msra.mxu0 0.0
        %790 = vmatprep.subr.mxu0 0.0
        %791 = vmatpush1.msra.mxu0 0.0
        %792 = vmatprep.subr.mxu0 0.0
        %793 = vmatpush1.msra.mxu0 0.0
        %794 = vmatprep.mubr.f32.mxu0 0.0
        %795 = vmatmul.mubr.f32.gmra.mrb[0].mxu0 %v692
        %v796 = vpop.f32.mrb[0].mxu0
        %v797 = vadd.f32 %v729, %v796
        %v798 = vpop.f32.mrb[0].mxu0
        %799 = vmatprep.mubr.f32.mxu0 0.0
        %800 = vmatmul.mubr.f32.gmra.mrb[0].mxu0 %v693
        %v801 = vpop.f32.mrb[0].mxu0
        %v802 = vadd.f32 %v729, %v801
        %v803 = vpop.f32.mrb[0].mxu0
        %804 = vmatprep.mubr.f32.mxu0 0.0
        %805 = vmatmul.mubr.f32.gmra.mrb[0].mxu0 %v694
        %v806 = vpop.f32.mrb[0].mxu0
        %v807 = vadd.f32 %v729, %v806
        %v808 = vpop.f32.mrb[0].mxu0
        %809 = vmatprep.mubr.f32.mxu0 0.0
        %810 = vmatmul.mubr.f32.gmra.mrb[0].mxu0 %v695
        %v811 = vpop.f32.mrb[0].mxu0
        %v812 = vadd.f32 %v729, %v811
        %v813 = vpop.f32.mrb[0].mxu0
        %814 = vmatprep.mubr.f32.mxu0 0.0
        %815 = vmatmul.mubr.f32.gmra.mrb[0].mxu0 %v696
        %v816 = vpop.f32.mrb[0].mxu0
        %v817 = vadd.f32 %v729, %v816
        %v818 = vpop.f32.mrb[0].mxu0
        %819 = vmatprep.mubr.f32.mxu0 0.0
        %820 = vmatmul.mubr.f32.gmra.mrb[0].mxu0 %v697
        %v821 = vpop.f32.mrb[0].mxu0
        %v822 = vadd.f32 %v729, %v821
        %v823 = vpop.f32.mrb[0].mxu0
        %824 = vmatprep.mubr.f32.mxu0 0.0
        %825 = vmatmul.mubr.f32.gmra.mrb[0].mxu0 %v698
        %v826 = vpop.f32.mrb[0].mxu0
        %v827 = vadd.f32 %v729, %v826
        %v828 = vpop.f32.mrb[0].mxu0
        %829 = vmatprep.mubr.f32.mxu0 0.0
        %830 = vmatmul.mubr.f32.gmra.mrb[0].mxu0 %v699
        %v831 = vpop.f32.mrb[0].mxu0
        %v832 = vadd.f32 %v729, %v831
        %v833 = vpop.f32.mrb[0].mxu0
        %834 = vmatprep.mubr.f32.mxu0 0.0
        %835 = vmatmul.mubr.f32.gmra.mrb[0].mxu0 %v700
        %v836 = vpop.f32.mrb[0].mxu0
        %v837 = vadd.f32 %v729, %v836
        %v838 = vpop.f32.mrb[0].mxu0
        %839 = vmatprep.mubr.f32.mxu0 0.0
        %840 = vmatmul.mubr.f32.gmra.mrb[0].mxu0 %v701
        %v841 = vpop.f32.mrb[0].mxu0
        %v842 = vadd.f32 %v729, %v841
        %v843 = vpop.f32.mrb[0].mxu0
        %844 = vmatprep.mubr.f32.mxu0 0.0
        %845 = vmatmul.mubr.f32.gmra.mrb[0].mxu0 %v702
        %v846 = vpop.f32.mrb[0].mxu0
        %v847 = vadd.f32 %v729, %v846
        %v848 = vpop.f32.mrb[0].mxu0
        %849 = vmatprep.mubr.f32.mxu0 0.0
        %850 = vmatmul.mubr.f32.gmra.mrb[0].mxu0 %v703
        %v851 = vpop.f32.mrb[0].mxu0
        %v852 = vadd.f32 %v729, %v851
        %v853 = vpop.f32.mrb[0].mxu0
        %854 = vmatprep.mubr.f32.mxu0 0.0
        %855 = vmatmul.mubr.f32.gmra.mrb[0].mxu0 %v704
        %v856 = vpop.f32.mrb[0].mxu0
        %v857 = vadd.f32 %v729, %v856
        %v858 = vpop.f32.mrb[0].mxu0
        %859 = vmatprep.mubr.f32.mxu0 0.0
        %860 = vmatmul.mubr.f32.gmra.mrb[0].mxu0 %v705
        %v861 = vpop.f32.mrb[0].mxu0
        %v862 = vadd.f32 %v729, %v861
        %v863 = vpop.f32.mrb[0].mxu0
        %864 = vmatprep.mubr.f32.mxu0 0.0
        %865 = vmatmul.mubr.f32.gmra.mrb[0].mxu0 %v706
        %v866 = vpop.f32.mrb[0].mxu0
        %v867 = vadd.f32 %v729, %v866
        %v868 = vpop.f32.mrb[0].mxu0
        %869 = vmatprep.mubr.f32.mxu0 0.0
        %870 = vmatmul.mubr.f32.gmra.mrb[0].mxu0 %v707
        %v871 = vpop.f32.mrb[0].mxu0
        %v872 = vadd.f32 %v729, %v871
        %v873 = vpop.f32.mrb[0].mxu0
        %874 = vdwg.mxu0
        %v875 = vtanh.pop %v797
        %v876 = vtanh.pop %v802
        %v877 = vtanh.pop %v807
        %v878 = vtanh.pop %v812
        %v879 = vtanh.pop %v817
        %v880 = vtanh.pop %v822
        %v881 = vtanh.pop %v827
        %v882 = vtanh.pop %v832
        %v883 = vtanh.pop %v837
        %v884 = vtanh.pop %v842
        %v885 = vtanh.pop %v847
        %v886 = vtanh.pop %v852
        %v887 = vtanh.pop %v857
        %v888 = vtanh.pop %v862
        %v889 = vtanh.pop %v867
        %v890 = vtanh.pop %v872
        %s891 = scalar_lea.vmem [#allocation3], 256
        %v892 = vld [vmem:[%s891] sm:$0xff]
        %v893 = vld [vmem:[%s891 + $0x8] sm:$0xff]
        %v894 = vld [vmem:[%s891 + $0x10] sm:$0xff]
        %v895 = vld [vmem:[%s891 + $0x18] sm:$0xff]
        %v896 = vld [vmem:[%s891 + $0x20] sm:$0xff]
        %v897 = vld [vmem:[%s891 + $0x28] sm:$0xff]
        %v898 = vld [vmem:[%s891 + $0x30] sm:$0xff]
        %v899 = vld [vmem:[%s891 + $0x38] sm:$0xff]
        %v900 = vld [vmem:[%s891 + $0x40] sm:$0xff]
        %v901 = vld [vmem:[%s891 + $0x48] sm:$0xff]
        %v902 = vld [vmem:[%s891 + $0x50] sm:$0xff]
        %v903 = vld [vmem:[%s891 + $0x58] sm:$0xff]
        %v904 = vld [vmem:[%s891 + $0x60] sm:$0xff]
        %v905 = vld [vmem:[%s891 + $0x68] sm:$0xff]
        %v906 = vld [vmem:[%s891 + $0x70] sm:$0xff]
        %v907 = vld [vmem:[%s891 + $0x78] sm:$0xff]
        %v908 = vld [vmem:[%s4 + $0x3] sm:$0x1]
        %v909 = vlaneseq
        %v910 = vshrl.u32 %v909, 7
        %v911 = vsub.s32 0, %v910
        %v912 = vrot.slane %v908, %v911
        %913 = vmatprep.subr.mxu0 0.0
        %914 = vmatpush1.msra.mxu0 %v892
        %915 = vmatprep.subr.mxu0 0.0
        %916 = vmatpush1.msra.mxu0 %v893
        %917 = vmatprep.subr.mxu0 0.0
        %918 = vmatpush1.msra.mxu0 %v894
        %919 = vmatprep.subr.mxu0 0.0
        %920 = vmatpush1.msra.mxu0 %v895
        %921 = vmatprep.subr.mxu0 0.0
        %922 = vmatpush1.msra.mxu0 %v896
        %923 = vmatprep.subr.mxu0 0.0
        %924 = vmatpush1.msra.mxu0 %v897
        %925 = vmatprep.subr.mxu0 0.0
        %926 = vmatpush1.msra.mxu0 %v898
        %927 = vmatprep.subr.mxu0 0.0
        %928 = vmatpush1.msra.mxu0 %v899
        %929 = vmatprep.subr.mxu0 0.0
        %930 = vmatpush1.msra.mxu0 %v900
        %931 = vmatprep.subr.mxu0 0.0
        %932 = vmatpush1.msra.mxu0 %v901
        %933 = vmatprep.subr.mxu0 0.0
        %934 = vmatpush1.msra.mxu0 %v902
        %935 = vmatprep.subr.mxu0 0.0
        %936 = vmatpush1.msra.mxu0 %v903
        %937 = vmatprep.subr.mxu0 0.0
        %938 = vmatpush1.msra.mxu0 %v904
        %939 = vmatprep.subr.mxu0 0.0
        %940 = vmatpush1.msra.mxu0 %v905
        %941 = vmatprep.subr.mxu0 0.0
        %942 = vmatpush1.msra.mxu0 %v906
        %943 = vmatprep.subr.mxu0 0.0
        %944 = vmatpush1.msra.mxu0 %v907
        %945 = vmatprep.subr.mxu0 0.0
        %946 = vmatpush1.msra.mxu0 0.0
        %947 = vmatprep.subr.mxu0 0.0
        %948 = vmatpush1.msra.mxu0 0.0
        %949 = vmatprep.subr.mxu0 0.0
        %950 = vmatpush1.msra.mxu0 0.0
        %951 = vmatprep.subr.mxu0 0.0
        %952 = vmatpush1.msra.mxu0 0.0
        %953 = vmatprep.subr.mxu0 0.0
        %954 = vmatpush1.msra.mxu0 0.0
        %955 = vmatprep.subr.mxu0 0.0
        %956 = vmatpush1.msra.mxu0 0.0
        %957 = vmatprep.subr.mxu0 0.0
        %958 = vmatpush1.msra.mxu0 0.0
        %959 = vmatprep.subr.mxu0 0.0
        %960 = vmatpush1.msra.mxu0 0.0
        %961 = vmatprep.subr.mxu0 0.0
        %962 = vmatpush1.msra.mxu0 0.0
        %963 = vmatprep.subr.mxu0 0.0
        %964 = vmatpush1.msra.mxu0 0.0
        %965 = vmatprep.subr.mxu0 0.0
        %966 = vmatpush1.msra.mxu0 0.0
        %967 = vmatprep.subr.mxu0 0.0
        %968 = vmatpush1.msra.mxu0 0.0
        %969 = vmatprep.subr.mxu0 0.0
        %970 = vmatpush1.msra.mxu0 0.0
        %971 = vmatprep.subr.mxu0 0.0
        %972 = vmatpush1.msra.mxu0 0.0
        %973 = vmatprep.subr.mxu0 0.0
        %974 = vmatpush1.msra.mxu0 0.0
        %975 = vmatprep.subr.mxu0 0.0
        %976 = vmatpush1.msra.mxu0 0.0
        %977 = vmatprep.mubr.f32.mxu0 0.0
        %978 = vmatmul.mubr.f32.gmra.mrb[0].mxu0 %v875
        %v979 = vpop.f32.mrb[0].mxu0
        %v980 = vadd.f32 %v912, %v979
        %v981 = vpop.f32.mrb[0].mxu0
        %982 = vmatprep.mubr.f32.mxu0 0.0
        %983 = vmatmul.mubr.f32.gmra.mrb[0].mxu0 %v876
        %v984 = vpop.f32.mrb[0].mxu0
        %v985 = vadd.f32 %v912, %v984
        %v986 = vpop.f32.mrb[0].mxu0
        %987 = vmatprep.mubr.f32.mxu0 0.0
        %988 = vmatmul.mubr.f32.gmra.mrb[0].mxu0 %v877
        %v989 = vpop.f32.mrb[0].mxu0
        %v990 = vadd.f32 %v912, %v989
        %v991 = vpop.f32.mrb[0].mxu0
        %992 = vmatprep.mubr.f32.mxu0 0.0
        %993 = vmatmul.mubr.f32.gmra.mrb[0].mxu0 %v878
        %v994 = vpop.f32.mrb[0].mxu0
        %v995 = vadd.f32 %v912, %v994
        %v996 = vpop.f32.mrb[0].mxu0
        %997 = vmatprep.mubr.f32.mxu0 0.0
        %998 = vmatmul.mubr.f32.gmra.mrb[0].mxu0 %v879
        %v999 = vpop.f32.mrb[0].mxu0
        %v1000 = vadd.f32 %v912, %v999
        %v1001 = vpop.f32.mrb[0].mxu0
        %1002 = vmatprep.mubr.f32.mxu0 0.0
        %1003 = vmatmul.mubr.f32.gmra.mrb[0].mxu0 %v880
        %v1004 = vpop.f32.mrb[0].mxu0
        %v1005 = vadd.f32 %v912, %v1004
        %v1006 = vpop.f32.mrb[0].mxu0
        %1007 = vmatprep.mubr.f32.mxu0 0.0
        %1008 = vmatmul.mubr.f32.gmra.mrb[0].mxu0 %v881
        %v1009 = vpop.f32.mrb[0].mxu0
        %v1010 = vadd.f32 %v912, %v1009
        %v1011 = vpop.f32.mrb[0].mxu0
        %1012 = vmatprep.mubr.f32.mxu0 0.0
        %1013 = vmatmul.mubr.f32.gmra.mrb[0].mxu0 %v882
        %v1014 = vpop.f32.mrb[0].mxu0
        %v1015 = vadd.f32 %v912, %v1014
        %v1016 = vpop.f32.mrb[0].mxu0
        %1017 = vmatprep.mubr.f32.mxu0 0.0
        %1018 = vmatmul.mubr.f32.gmra.mrb[0].mxu0 %v883
        %v1019 = vpop.f32.mrb[0].mxu0
        %v1020 = vadd.f32 %v912, %v1019
        %v1021 = vpop.f32.mrb[0].mxu0
        %1022 = vmatprep.mubr.f32.mxu0 0.0
        %1023 = vmatmul.mubr.f32.gmra.mrb[0].mxu0 %v884
        %v1024 = vpop.f32.mrb[0].mxu0
        %v1025 = vadd.f32 %v912, %v1024
        %v1026 = vpop.f32.mrb[0].mxu0
        %1027 = vmatprep.mubr.f32.mxu0 0.0
        %1028 = vmatmul.mubr.f32.gmra.mrb[0].mxu0 %v885
        %v1029 = vpop.f32.mrb[0].mxu0
        %v1030 = vadd.f32 %v912, %v1029
        %v1031 = vpop.f32.mrb[0].mxu0
        %1032 = vmatprep.mubr.f32.mxu0 0.0
        %1033 = vmatmul.mubr.f32.gmra.mrb[0].mxu0 %v886
        %v1034 = vpop.f32.mrb[0].mxu0
        %v1035 = vadd.f32 %v912, %v1034
        %v1036 = vpop.f32.mrb[0].mxu0
        %1037 = vmatprep.mubr.f32.mxu0 0.0
        %1038 = vmatmul.mubr.f32.gmra.mrb[0].mxu0 %v887
        %v1039 = vpop.f32.mrb[0].mxu0
        %v1040 = vadd.f32 %v912, %v1039
        %v1041 = vpop.f32.mrb[0].mxu0
        %1042 = vmatprep.mubr.f32.mxu0 0.0
        %1043 = vmatmul.mubr.f32.gmra.mrb[0].mxu0 %v888
        %v1044 = vpop.f32.mrb[0].mxu0
        %v1045 = vadd.f32 %v912, %v1044
        %v1046 = vpop.f32.mrb[0].mxu0
        %1047 = vmatprep.mubr.f32.mxu0 0.0
        %1048 = vmatmul.mubr.f32.gmra.mrb[0].mxu0 %v889
        %v1049 = vpop.f32.mrb[0].mxu0
        %v1050 = vadd.f32 %v912, %v1049
        %v1051 = vpop.f32.mrb[0].mxu0
        %1052 = vmatprep.mubr.f32.mxu0 0.0
        %1053 = vmatmul.mubr.f32.gmra.mrb[0].mxu0 %v890
        %v1054 = vpop.f32.mrb[0].mxu0
        %v1055 = vadd.f32 %v912, %v1054
        %v1056 = vpop.f32.mrb[0].mxu0
        %1057 = vdwg.mxu0
        %v1058 = vtanh.pop %v980
        %v1059 = vtanh.pop %v985
        %v1060 = vtanh.pop %v990
        %v1061 = vtanh.pop %v995
        %v1062 = vtanh.pop %v1000
        %v1063 = vtanh.pop %v1005
        %v1064 = vtanh.pop %v1010
        %v1065 = vtanh.pop %v1015
        %v1066 = vtanh.pop %v1020
        %v1067 = vtanh.pop %v1025
        %v1068 = vtanh.pop %v1030
        %v1069 = vtanh.pop %v1035
        %v1070 = vtanh.pop %v1040
        %v1071 = vtanh.pop %v1045
        %v1072 = vtanh.pop %v1050
        %v1073 = vtanh.pop %v1055
        %s1074 = scalar_lea.vmem [#allocation3], 384
        %v1075 = vld [vmem:[%s1074] sm:$0xff]
        %v1076 = vld [vmem:[%s1074 + $0x8] sm:$0xff]
        %v1077 = vld [vmem:[%s1074 + $0x10] sm:$0xff]
        %v1078 = vld [vmem:[%s1074 + $0x18] sm:$0xff]
        %v1079 = vld [vmem:[%s1074 + $0x20] sm:$0xff]
        %v1080 = vld [vmem:[%s1074 + $0x28] sm:$0xff]
        %v1081 = vld [vmem:[%s1074 + $0x30] sm:$0xff]
        %v1082 = vld [vmem:[%s1074 + $0x38] sm:$0xff]
        %v1083 = vld [vmem:[%s1074 + $0x40] sm:$0xff]
        %v1084 = vld [vmem:[%s1074 + $0x48] sm:$0xff]
        %v1085 = vld [vmem:[%s1074 + $0x50] sm:$0xff]
        %v1086 = vld [vmem:[%s1074 + $0x58] sm:$0xff]
        %v1087 = vld [vmem:[%s1074 + $0x60] sm:$0xff]
        %v1088 = vld [vmem:[%s1074 + $0x68] sm:$0xff]
        %v1089 = vld [vmem:[%s1074 + $0x70] sm:$0xff]
        %v1090 = vld [vmem:[%s1074 + $0x78] sm:$0xff]
        %v1091 = vld [vmem:[%s4 + $0x4] sm:$0x1]
        %v1092 = vlaneseq
        %v1093 = vshrl.u32 %v1092, 7
        %v1094 = vsub.s32 0, %v1093
        %v1095 = vrot.slane %v1091, %v1094
        %1096 = vmatprep.subr.mxu0 0.0
        %1097 = vmatpush1.msra.mxu0 %v1075
        %1098 = vmatprep.subr.mxu0 0.0
        %1099 = vmatpush1.msra.mxu0 %v1076
        %1100 = vmatprep.subr.mxu0 0.0
        %1101 = vmatpush1.msra.mxu0 %v1077
        %1102 = vmatprep.subr.mxu0 0.0
        %1103 = vmatpush1.msra.mxu0 %v1078
        %1104 = vmatprep.subr.mxu0 0.0
        %1105 = vmatpush1.msra.mxu0 %v1079
        %1106 = vmatprep.subr.mxu0 0.0
        %1107 = vmatpush1.msra.mxu0 %v1080
        %1108 = vmatprep.subr.mxu0 0.0
        %1109 = vmatpush1.msra.mxu0 %v1081
        %1110 = vmatprep.subr.mxu0 0.0
        %1111 = vmatpush1.msra.mxu0 %v1082
        %1112 = vmatprep.subr.mxu0 0.0
        %1113 = vmatpush1.msra.mxu0 %v1083
        %1114 = vmatprep.subr.mxu0 0.0
        %1115 = vmatpush1.msra.mxu0 %v1084
        %1116 = vmatprep.subr.mxu0 0.0
        %1117 = vmatpush1.msra.mxu0 %v1085
        %1118 = vmatprep.subr.mxu0 0.0
        %1119 = vmatpush1.msra.mxu0 %v1086
        %1120 = vmatprep.subr.mxu0 0.0
        %1121 = vmatpush1.msra.mxu0 %v1087
        %1122 = vmatprep.subr.mxu0 0.0
        %1123 = vmatpush1.msra.mxu0 %v1088
        %1124 = vmatprep.subr.mxu0 0.0
        %1125 = vmatpush1.msra.mxu0 %v1089
        %1126 = vmatprep.subr.mxu0 0.0
        %1127 = vmatpush1.msra.mxu0 %v1090
        %1128 = vmatprep.subr.mxu0 0.0
        %1129 = vmatpush1.msra.mxu0 0.0
        %1130 = vmatprep.subr.mxu0 0.0
        %1131 = vmatpush1.msra.mxu0 0.0
        %1132 = vmatprep.subr.mxu0 0.0
        %1133 = vmatpush1.msra.mxu0 0.0
        %1134 = vmatprep.subr.mxu0 0.0
        %1135 = vmatpush1.msra.mxu0 0.0
        %1136 = vmatprep.subr.mxu0 0.0
        %1137 = vmatpush1.msra.mxu0 0.0
        %1138 = vmatprep.subr.mxu0 0.0
        %1139 = vmatpush1.msra.mxu0 0.0
        %1140 = vmatprep.subr.mxu0 0.0
        %1141 = vmatpush1.msra.mxu0 0.0
        %1142 = vmatprep.subr.mxu0 0.0
        %1143 = vmatpush1.msra.mxu0 0.0
        %1144 = vmatprep.subr.mxu0 0.0
        %1145 = vmatpush1.msra.mxu0 0.0
        %1146 = vmatprep.subr.mxu0 0.0
        %1147 = vmatpush1.msra.mxu0 0.0
        %1148 = vmatprep.subr.mxu0 0.0
        %1149 = vmatpush1.msra.mxu0 0.0
        %1150 = vmatprep.subr.mxu0 0.0
        %1151 = vmatpush1.msra.mxu0 0.0
        %1152 = vmatprep.subr.mxu0 0.0
        %1153 = vmatpush1.msra.mxu0 0.0
        %1154 = vmatprep.subr.mxu0 0.0
        %1155 = vmatpush1.msra.mxu0 0.0
        %1156 = vmatprep.subr.mxu0 0.0
        %1157 = vmatpush1.msra.mxu0 0.0
        %1158 = vmatprep.subr.mxu0 0.0
        %1159 = vmatpush1.msra.mxu0 0.0
        %1160 = vmatprep.mubr.f32.mxu0 0.0
        %1161 = vmatmul.mubr.f32.gmra.mrb[0].mxu0 %v1058
        %v1162 = vpop.f32.mrb[0].mxu0
        %v1163 = vadd.f32 %v1095, %v1162
        %v1164 = vpop.f32.mrb[0].mxu0
        %1165 = vmatprep.mubr.f32.mxu0 0.0
        %1166 = vmatmul.mubr.f32.gmra.mrb[0].mxu0 %v1059
        %v1167 = vpop.f32.mrb[0].mxu0
        %v1168 = vadd.f32 %v1095, %v1167
        %v1169 = vpop.f32.mrb[0].mxu0
        %1170 = vmatprep.mubr.f32.mxu0 0.0
        %1171 = vmatmul.mubr.f32.gmra.mrb[0].mxu0 %v1060
        %v1172 = vpop.f32.mrb[0].mxu0
        %v1173 = vadd.f32 %v1095, %v1172
        %v1174 = vpop.f32.mrb[0].mxu0
        %1175 = vmatprep.mubr.f32.mxu0 0.0
        %1176 = vmatmul.mubr.f32.gmra.mrb[0].mxu0 %v1061
        %v1177 = vpop.f32.mrb[0].mxu0
        %v1178 = vadd.f32 %v1095, %v1177
        %v1179 = vpop.f32.mrb[0].mxu0
        %1180 = vmatprep.mubr.f32.mxu0 0.0
        %1181 = vmatmul.mubr.f32.gmra.mrb[0].mxu0 %v1062
        %v1182 = vpop.f32.mrb[0].mxu0
        %v1183 = vadd.f32 %v1095, %v1182
        %v1184 = vpop.f32.mrb[0].mxu0
        %1185 = vmatprep.mubr.f32.mxu0 0.0
        %1186 = vmatmul.mubr.f32.gmra.mrb[0].mxu0 %v1063
        %v1187 = vpop.f32.mrb[0].mxu0
        %v1188 = vadd.f32 %v1095, %v1187
        %v1189 = vpop.f32.mrb[0].mxu0
        %1190 = vmatprep.mubr.f32.mxu0 0.0
        %1191 = vmatmul.mubr.f32.gmra.mrb[0].mxu0 %v1064
        %v1192 = vpop.f32.mrb[0].mxu0
        %v1193 = vadd.f32 %v1095, %v1192
        %v1194 = vpop.f32.mrb[0].mxu0
        %1195 = vmatprep.mubr.f32.mxu0 0.0
        %1196 = vmatmul.mubr.f32.gmra.mrb[0].mxu0 %v1065
        %v1197 = vpop.f32.mrb[0].mxu0
        %v1198 = vadd.f32 %v1095, %v1197
        %v1199 = vpop.f32.mrb[0].mxu0
        %1200 = vmatprep.mubr.f32.mxu0 0.0
        %1201 = vmatmul.mubr.f32.gmra.mrb[0].mxu0 %v1066
        %v1202 = vpop.f32.mrb[0].mxu0
        %v1203 = vadd.f32 %v1095, %v1202
        %v1204 = vpop.f32.mrb[0].mxu0
        %1205 = vmatprep.mubr.f32.mxu0 0.0
        %1206 = vmatmul.mubr.f32.gmra.mrb[0].mxu0 %v1067
        %v1207 = vpop.f32.mrb[0].mxu0
        %v1208 = vadd.f32 %v1095, %v1207
        %v1209 = vpop.f32.mrb[0].mxu0
        %1210 = vmatprep.mubr.f32.mxu0 0.0
        %1211 = vmatmul.mubr.f32.gmra.mrb[0].mxu0 %v1068
        %v1212 = vpop.f32.mrb[0].mxu0
        %v1213 = vadd.f32 %v1095, %v1212
        %v1214 = vpop.f32.mrb[0].mxu0
        %1215 = vmatprep.mubr.f32.mxu0 0.0
        %1216 = vmatmul.mubr.f32.gmra.mrb[0].mxu0 %v1069
        %v1217 = vpop.f32.mrb[0].mxu0
        %v1218 = vadd.f32 %v1095, %v1217
        %v1219 = vpop.f32.mrb[0].mxu0
        %1220 = vmatprep.mubr.f32.mxu0 0.0
        %1221 = vmatmul.mubr.f32.gmra.mrb[0].mxu0 %v1070
        %v1222 = vpop.f32.mrb[0].mxu0
        %v1223 = vadd.f32 %v1095, %v1222
        %v1224 = vpop.f32.mrb[0].mxu0
        %1225 = vmatprep.mubr.f32.mxu0 0.0
        %1226 = vmatmul.mubr.f32.gmra.mrb[0].mxu0 %v1071
        %v1227 = vpop.f32.mrb[0].mxu0
        %v1228 = vadd.f32 %v1095, %v1227
        %v1229 = vpop.f32.mrb[0].mxu0
        %1230 = vmatprep.mubr.f32.mxu0 0.0
        %1231 = vmatmul.mubr.f32.gmra.mrb[0].mxu0 %v1072
        %v1232 = vpop.f32.mrb[0].mxu0
        %v1233 = vadd.f32 %v1095, %v1232
        %v1234 = vpop.f32.mrb[0].mxu0
        %1235 = vmatprep.mubr.f32.mxu0 0.0
        %1236 = vmatmul.mubr.f32.gmra.mrb[0].mxu0 %v1073
        %v1237 = vpop.f32.mrb[0].mxu0
        %v1238 = vadd.f32 %v1095, %v1237
        %v1239 = vpop.f32.mrb[0].mxu0
        %1240 = vdwg.mxu0
        %v1241 = vtanh.pop %v1163
        %v1242 = vtanh.pop %v1168
        %v1243 = vtanh.pop %v1173
        %v1244 = vtanh.pop %v1178
        %v1245 = vtanh.pop %v1183
        %v1246 = vtanh.pop %v1188
        %v1247 = vtanh.pop %v1193
        %v1248 = vtanh.pop %v1198
        %v1249 = vtanh.pop %v1203
        %v1250 = vtanh.pop %v1208
        %v1251 = vtanh.pop %v1213
        %v1252 = vtanh.pop %v1218
        %v1253 = vtanh.pop %v1223
        %v1254 = vtanh.pop %v1228
        %v1255 = vtanh.pop %v1233
        %v1256 = vtanh.pop %v1238
        %s1257 = scalar_lea.vmem [#allocation3], 512
        %v1258 = vld [vmem:[%s1257] sm:$0xff]
        %v1259 = vld [vmem:[%s1257 + $0x8] sm:$0xff]
        %v1260 = vld [vmem:[%s1257 + $0x10] sm:$0xff]
        %v1261 = vld [vmem:[%s1257 + $0x18] sm:$0xff]
        %v1262 = vld [vmem:[%s1257 + $0x20] sm:$0xff]
        %v1263 = vld [vmem:[%s1257 + $0x28] sm:$0xff]
        %v1264 = vld [vmem:[%s1257 + $0x30] sm:$0xff]
        %v1265 = vld [vmem:[%s1257 + $0x38] sm:$0xff]
        %v1266 = vld [vmem:[%s1257 + $0x40] sm:$0xff]
        %v1267 = vld [vmem:[%s1257 + $0x48] sm:$0xff]
        %v1268 = vld [vmem:[%s1257 + $0x50] sm:$0xff]
        %v1269 = vld [vmem:[%s1257 + $0x58] sm:$0xff]
        %v1270 = vld [vmem:[%s1257 + $0x60] sm:$0xff]
        %v1271 = vld [vmem:[%s1257 + $0x68] sm:$0xff]
        %v1272 = vld [vmem:[%s1257 + $0x70] sm:$0xff]
        %v1273 = vld [vmem:[%s1257 + $0x78] sm:$0xff]
        %v1274 = vld [vmem:[%s4 + $0x5] sm:$0x1]
        %v1275 = vlaneseq
        %v1276 = vshrl.u32 %v1275, 7
        %v1277 = vsub.s32 0, %v1276
        %v1278 = vrot.slane %v1274, %v1277
        %1279 = vmatprep.subr.mxu0 0.0
        %1280 = vmatpush1.msra.mxu0 %v1258
        %1281 = vmatprep.subr.mxu0 0.0
        %1282 = vmatpush1.msra.mxu0 %v1259
        %1283 = vmatprep.subr.mxu0 0.0
        %1284 = vmatpush1.msra.mxu0 %v1260
        %1285 = vmatprep.subr.mxu0 0.0
        %1286 = vmatpush1.msra.mxu0 %v1261
        %1287 = vmatprep.subr.mxu0 0.0
        %1288 = vmatpush1.msra.mxu0 %v1262
        %1289 = vmatprep.subr.mxu0 0.0
        %1290 = vmatpush1.msra.mxu0 %v1263
        %1291 = vmatprep.subr.mxu0 0.0
        %1292 = vmatpush1.msra.mxu0 %v1264
        %1293 = vmatprep.subr.mxu0 0.0
        %1294 = vmatpush1.msra.mxu0 %v1265
        %1295 = vmatprep.subr.mxu0 0.0
        %1296 = vmatpush1.msra.mxu0 %v1266
        %1297 = vmatprep.subr.mxu0 0.0
        %1298 = vmatpush1.msra.mxu0 %v1267
        %1299 = vmatprep.subr.mxu0 0.0
        %1300 = vmatpush1.msra.mxu0 %v1268
        %1301 = vmatprep.subr.mxu0 0.0
        %1302 = vmatpush1.msra.mxu0 %v1269
        %1303 = vmatprep.subr.mxu0 0.0
        %1304 = vmatpush1.msra.mxu0 %v1270
        %1305 = vmatprep.subr.mxu0 0.0
        %1306 = vmatpush1.msra.mxu0 %v1271
        %1307 = vmatprep.subr.mxu0 0.0
        %1308 = vmatpush1.msra.mxu0 %v1272
        %1309 = vmatprep.subr.mxu0 0.0
        %1310 = vmatpush1.msra.mxu0 %v1273
        %1311 = vmatprep.subr.mxu0 0.0
        %1312 = vmatpush1.msra.mxu0 0.0
        %1313 = vmatprep.subr.mxu0 0.0
        %1314 = vmatpush1.msra.mxu0 0.0
        %1315 = vmatprep.subr.mxu0 0.0
        %1316 = vmatpush1.msra.mxu0 0.0
        %1317 = vmatprep.subr.mxu0 0.0
        %1318 = vmatpush1.msra.mxu0 0.0
        %1319 = vmatprep.subr.mxu0 0.0
        %1320 = vmatpush1.msra.mxu0 0.0
        %1321 = vmatprep.subr.mxu0 0.0
        %1322 = vmatpush1.msra.mxu0 0.0
        %1323 = vmatprep.subr.mxu0 0.0
        %1324 = vmatpush1.msra.mxu0 0.0
        %1325 = vmatprep.subr.mxu0 0.0
        %1326 = vmatpush1.msra.mxu0 0.0
        %1327 = vmatprep.subr.mxu0 0.0
        %1328 = vmatpush1.msra.mxu0 0.0
        %1329 = vmatprep.subr.mxu0 0.0
        %1330 = vmatpush1.msra.mxu0 0.0
        %1331 = vmatprep.subr.mxu0 0.0
        %1332 = vmatpush1.msra.mxu0 0.0
        %1333 = vmatprep.subr.mxu0 0.0
        %1334 = vmatpush1.msra.mxu0 0.0
        %1335 = vmatprep.subr.mxu0 0.0
        %1336 = vmatpush1.msra.mxu0 0.0
        %1337 = vmatprep.subr.mxu0 0.0
        %1338 = vmatpush1.msra.mxu0 0.0
        %1339 = vmatprep.subr.mxu0 0.0
        %1340 = vmatpush1.msra.mxu0 0.0
        %1341 = vmatprep.subr.mxu0 0.0
        %1342 = vmatpush1.msra.mxu0 0.0
        %1343 = vmatprep.mubr.f32.mxu0 0.0
        %1344 = vmatmul.mubr.f32.gmra.mrb[0].mxu0 %v1241
        %v1345 = vpop.f32.mrb[0].mxu0
        %v1346 = vadd.f32 %v1278, %v1345
        %v1347 = vpop.f32.mrb[0].mxu0
        %1348 = vmatprep.mubr.f32.mxu0 0.0
        %1349 = vmatmul.mubr.f32.gmra.mrb[0].mxu0 %v1242
        %v1350 = vpop.f32.mrb[0].mxu0
        %v1351 = vadd.f32 %v1278, %v1350
        %v1352 = vpop.f32.mrb[0].mxu0
        %1353 = vmatprep.mubr.f32.mxu0 0.0
        %1354 = vmatmul.mubr.f32.gmra.mrb[0].mxu0 %v1243
        %v1355 = vpop.f32.mrb[0].mxu0
        %v1356 = vadd.f32 %v1278, %v1355
        %v1357 = vpop.f32.mrb[0].mxu0
        %1358 = vmatprep.mubr.f32.mxu0 0.0
        %1359 = vmatmul.mubr.f32.gmra.mrb[0].mxu0 %v1244
        %v1360 = vpop.f32.mrb[0].mxu0
        %v1361 = vadd.f32 %v1278, %v1360
        %v1362 = vpop.f32.mrb[0].mxu0
        %1363 = vmatprep.mubr.f32.mxu0 0.0
        %1364 = vmatmul.mubr.f32.gmra.mrb[0].mxu0 %v1245
        %v1365 = vpop.f32.mrb[0].mxu0
        %v1366 = vadd.f32 %v1278, %v1365
        %v1367 = vpop.f32.mrb[0].mxu0
        %1368 = vmatprep.mubr.f32.mxu0 0.0
        %1369 = vmatmul.mubr.f32.gmra.mrb[0].mxu0 %v1246
        %v1370 = vpop.f32.mrb[0].mxu0
        %v1371 = vadd.f32 %v1278, %v1370
        %v1372 = vpop.f32.mrb[0].mxu0
        %1373 = vmatprep.mubr.f32.mxu0 0.0
        %1374 = vmatmul.mubr.f32.gmra.mrb[0].mxu0 %v1247
        %v1375 = vpop.f32.mrb[0].mxu0
        %v1376 = vadd.f32 %v1278, %v1375
        %v1377 = vpop.f32.mrb[0].mxu0
        %1378 = vmatprep.mubr.f32.mxu0 0.0
        %1379 = vmatmul.mubr.f32.gmra.mrb[0].mxu0 %v1248
        %v1380 = vpop.f32.mrb[0].mxu0
        %v1381 = vadd.f32 %v1278, %v1380
        %v1382 = vpop.f32.mrb[0].mxu0
        %1383 = vmatprep.mubr.f32.mxu0 0.0
        %1384 = vmatmul.mubr.f32.gmra.mrb[0].mxu0 %v1249
        %v1385 = vpop.f32.mrb[0].mxu0
        %v1386 = vadd.f32 %v1278, %v1385
        %v1387 = vpop.f32.mrb[0].mxu0
        %1388 = vmatprep.mubr.f32.mxu0 0.0
        %1389 = vmatmul.mubr.f32.gmra.mrb[0].mxu0 %v1250
        %v1390 = vpop.f32.mrb[0].mxu0
        %v1391 = vadd.f32 %v1278, %v1390
        %v1392 = vpop.f32.mrb[0].mxu0
        %1393 = vmatprep.mubr.f32.mxu0 0.0
        %1394 = vmatmul.mubr.f32.gmra.mrb[0].mxu0 %v1251
        %v1395 = vpop.f32.mrb[0].mxu0
        %v1396 = vadd.f32 %v1278, %v1395
        %v1397 = vpop.f32.mrb[0].mxu0
        %1398 = vmatprep.mubr.f32.mxu0 0.0
        %1399 = vmatmul.mubr.f32.gmra.mrb[0].mxu0 %v1252
        %v1400 = vpop.f32.mrb[0].mxu0
        %v1401 = vadd.f32 %v1278, %v1400
        %v1402 = vpop.f32.mrb[0].mxu0
        %1403 = vmatprep.mubr.f32.mxu0 0.0
        %1404 = vmatmul.mubr.f32.gmra.mrb[0].mxu0 %v1253
        %v1405 = vpop.f32.mrb[0].mxu0
        %v1406 = vadd.f32 %v1278, %v1405
        %v1407 = vpop.f32.mrb[0].mxu0
        %1408 = vmatprep.mubr.f32.mxu0 0.0
        %1409 = vmatmul.mubr.f32.gmra.mrb[0].mxu0 %v1254
        %v1410 = vpop.f32.mrb[0].mxu0
        %v1411 = vadd.f32 %v1278, %v1410
        %v1412 = vpop.f32.mrb[0].mxu0
        %1413 = vmatprep.mubr.f32.mxu0 0.0
        %1414 = vmatmul.mubr.f32.gmra.mrb[0].mxu0 %v1255
        %v1415 = vpop.f32.mrb[0].mxu0
        %v1416 = vadd.f32 %v1278, %v1415
        %v1417 = vpop.f32.mrb[0].mxu0
        %1418 = vmatprep.mubr.f32.mxu0 0.0
        %1419 = vmatmul.mubr.f32.gmra.mrb[0].mxu0 %v1256
        %v1420 = vpop.f32.mrb[0].mxu0
        %v1421 = vadd.f32 %v1278, %v1420
        %v1422 = vpop.f32.mrb[0].mxu0
        %1423 = vdwg.mxu0
        %v1424 = vtanh.pop %v1346
        %v1425 = vtanh.pop %v1351
        %v1426 = vtanh.pop %v1356
        %v1427 = vtanh.pop %v1361
        %v1428 = vtanh.pop %v1366
        %v1429 = vtanh.pop %v1371
        %v1430 = vtanh.pop %v1376
        %v1431 = vtanh.pop %v1381
        %v1432 = vtanh.pop %v1386
        %v1433 = vtanh.pop %v1391
        %v1434 = vtanh.pop %v1396
        %v1435 = vtanh.pop %v1401
        %v1436 = vtanh.pop %v1406
        %v1437 = vtanh.pop %v1411
        %v1438 = vtanh.pop %v1416
        %v1439 = vtanh.pop %v1421
        %v1440 = vld [vmem:[%s3] sm:$0xff]
        %v1441 = vld [vmem:[%s3 + $0x8] sm:$0xff]
        %v1442 = vld [vmem:[%s3 + $0x10] sm:$0xff]
        %v1443 = vld [vmem:[%s3 + $0x18] sm:$0xff]
        %v1444 = vld [vmem:[%s3 + $0x20] sm:$0xff]
        %v1445 = vld [vmem:[%s3 + $0x28] sm:$0xff]
        %v1446 = vld [vmem:[%s3 + $0x30] sm:$0xff]
        %v1447 = vld [vmem:[%s3 + $0x38] sm:$0xff]
        %v1448 = vld [vmem:[%s3 + $0x40] sm:$0xff]
        %v1449 = vld [vmem:[%s3 + $0x48] sm:$0xff]
        %v1450 = vld [vmem:[%s3 + $0x50] sm:$0xff]
        %v1451 = vld [vmem:[%s3 + $0x58] sm:$0xff]
        %v1452 = vld [vmem:[%s3 + $0x60] sm:$0xff]
        %v1453 = vld [vmem:[%s3 + $0x68] sm:$0xff]
        %v1454 = vld [vmem:[%s3 + $0x70] sm:$0xff]
        %v1455 = vld [vmem:[%s3 + $0x78] sm:$0xff]
        %v1456 = vld [vmem:[#allocation2] sm:$0x1]
        %v1458 = vlaneseq
        %v1459 = vshrl.u32 %v1458, 7
        %v1460 = vsub.s32 0, %v1459
        %v1461 = vrot.slane %v1456, %v1460
        %1463 = vmatprep.subr.mxu0 0.0
        %1464 = vmatpush1.msra.mxu0 %v1440
        %1465 = vmatprep.subr.mxu0 0.0
        %1466 = vmatpush1.msra.mxu0 %v1441
        %1467 = vmatprep.subr.mxu0 0.0
        %1468 = vmatpush1.msra.mxu0 %v1442
        %1469 = vmatprep.subr.mxu0 0.0
        %1470 = vmatpush1.msra.mxu0 %v1443
        %1471 = vmatprep.subr.mxu0 0.0
        %1472 = vmatpush1.msra.mxu0 %v1444
        %1473 = vmatprep.subr.mxu0 0.0
        %1474 = vmatpush1.msra.mxu0 %v1445
        %1475 = vmatprep.subr.mxu0 0.0
        %1476 = vmatpush1.msra.mxu0 %v1446
        %1477 = vmatprep.subr.mxu0 0.0
        %1478 = vmatpush1.msra.mxu0 %v1447
        %1479 = vmatprep.subr.mxu0 0.0
        %1480 = vmatpush1.msra.mxu0 %v1448
        %1481 = vmatprep.subr.mxu0 0.0
        %1482 = vmatpush1.msra.mxu0 %v1449
        %1483 = vmatprep.subr.mxu0 0.0
        %1484 = vmatpush1.msra.mxu0 %v1450
        %1485 = vmatprep.subr.mxu0 0.0
        %1486 = vmatpush1.msra.mxu0 %v1451
        %1487 = vmatprep.subr.mxu0 0.0
        %1488 = vmatpush1.msra.mxu0 %v1452
        %1489 = vmatprep.subr.mxu0 0.0
        %1490 = vmatpush1.msra.mxu0 %v1453
        %1491 = vmatprep.subr.mxu0 0.0
        %1492 = vmatpush1.msra.mxu0 %v1454
        %1493 = vmatprep.subr.mxu0 0.0
        %1494 = vmatpush1.msra.mxu0 %v1455
        %1495 = vmatprep.subr.mxu0 0.0
        %1496 = vmatpush1.msra.mxu0 0.0
        %1497 = vmatprep.subr.mxu0 0.0
        %1498 = vmatpush1.msra.mxu0 0.0
        %1499 = vmatprep.subr.mxu0 0.0
        %1500 = vmatpush1.msra.mxu0 0.0
        %1501 = vmatprep.subr.mxu0 0.0
        %1502 = vmatpush1.msra.mxu0 0.0
        %1503 = vmatprep.subr.mxu0 0.0
        %1504 = vmatpush1.msra.mxu0 0.0
        %1505 = vmatprep.subr.mxu0 0.0
        %1506 = vmatpush1.msra.mxu0 0.0
        %1507 = vmatprep.subr.mxu0 0.0
        %1508 = vmatpush1.msra.mxu0 0.0
        %1509 = vmatprep.subr.mxu0 0.0
        %1510 = vmatpush1.msra.mxu0 0.0
        %1511 = vmatprep.subr.mxu0 0.0
        %1512 = vmatpush1.msra.mxu0 0.0
        %1513 = vmatprep.subr.mxu0 0.0
        %1514 = vmatpush1.msra.mxu0 0.0
        %1515 = vmatprep.subr.mxu0 0.0
        %1516 = vmatpush1.msra.mxu0 0.0
        %1517 = vmatprep.subr.mxu0 0.0
        %1518 = vmatpush1.msra.mxu0 0.0
        %1519 = vmatprep.subr.mxu0 0.0
        %1520 = vmatpush1.msra.mxu0 0.0
        %1521 = vmatprep.subr.mxu0 0.0
        %1522 = vmatpush1.msra.mxu0 0.0
        %1523 = vmatprep.subr.mxu0 0.0
        %1524 = vmatpush1.msra.mxu0 0.0
        %1525 = vmatprep.subr.mxu0 0.0
        %1526 = vmatpush1.msra.mxu0 0.0
        %1527 = vmatprep.mubr.f32.mxu0 0.0
        %1528 = vmatmul.mubr.f32.gmra.mrb[0].mxu0 %v1424
        %v1529 = vpop.f32.mrb[0].mxu0
        %v1530 = vadd.f32 %v1461, %v1529
        %v1531 = vpop.f32.mrb[0].mxu0
        %1532 = vmatprep.mubr.f32.mxu0 0.0
        %1533 = vmatmul.mubr.f32.gmra.mrb[0].mxu0 %v1425
        %v1534 = vpop.f32.mrb[0].mxu0
        %v1535 = vadd.f32 %v1461, %v1534
        %v1536 = vpop.f32.mrb[0].mxu0
        %1537 = vmatprep.mubr.f32.mxu0 0.0
        %1538 = vmatmul.mubr.f32.gmra.mrb[0].mxu0 %v1426
        %v1539 = vpop.f32.mrb[0].mxu0
        %v1540 = vadd.f32 %v1461, %v1539
        %v1541 = vpop.f32.mrb[0].mxu0
        %1542 = vmatprep.mubr.f32.mxu0 0.0
        %1543 = vmatmul.mubr.f32.gmra.mrb[0].mxu0 %v1427
        %v1544 = vpop.f32.mrb[0].mxu0
        %v1545 = vadd.f32 %v1461, %v1544
        %v1546 = vpop.f32.mrb[0].mxu0
        %1547 = vmatprep.mubr.f32.mxu0 0.0
        %1548 = vmatmul.mubr.f32.gmra.mrb[0].mxu0 %v1428
        %v1549 = vpop.f32.mrb[0].mxu0
        %v1550 = vadd.f32 %v1461, %v1549
        %v1551 = vpop.f32.mrb[0].mxu0
        %1552 = vmatprep.mubr.f32.mxu0 0.0
        %1553 = vmatmul.mubr.f32.gmra.mrb[0].mxu0 %v1429
        %v1554 = vpop.f32.mrb[0].mxu0
        %v1555 = vadd.f32 %v1461, %v1554
        %v1556 = vpop.f32.mrb[0].mxu0
        %1557 = vmatprep.mubr.f32.mxu0 0.0
        %1558 = vmatmul.mubr.f32.gmra.mrb[0].mxu0 %v1430
        %v1559 = vpop.f32.mrb[0].mxu0
        %v1560 = vadd.f32 %v1461, %v1559
        %v1561 = vpop.f32.mrb[0].mxu0
        %1562 = vmatprep.mubr.f32.mxu0 0.0
        %1563 = vmatmul.mubr.f32.gmra.mrb[0].mxu0 %v1431
        %v1564 = vpop.f32.mrb[0].mxu0
        %v1565 = vadd.f32 %v1461, %v1564
        %v1566 = vpop.f32.mrb[0].mxu0
        %1567 = vmatprep.mubr.f32.mxu0 0.0
        %1568 = vmatmul.mubr.f32.gmra.mrb[0].mxu0 %v1432
        %v1569 = vpop.f32.mrb[0].mxu0
        %v1570 = vadd.f32 %v1461, %v1569
        %v1571 = vpop.f32.mrb[0].mxu0
        %1572 = vmatprep.mubr.f32.mxu0 0.0
        %1573 = vmatmul.mubr.f32.gmra.mrb[0].mxu0 %v1433
        %v1574 = vpop.f32.mrb[0].mxu0
        %v1575 = vadd.f32 %v1461, %v1574
        %v1576 = vpop.f32.mrb[0].mxu0
        %1577 = vmatprep.mubr.f32.mxu0 0.0
        %1578 = vmatmul.mubr.f32.gmra.mrb[0].mxu0 %v1434
        %v1579 = vpop.f32.mrb[0].mxu0
        %v1580 = vadd.f32 %v1461, %v1579
        %v1581 = vpop.f32.mrb[0].mxu0
        %1582 = vmatprep.mubr.f32.mxu0 0.0
        %1583 = vmatmul.mubr.f32.gmra.mrb[0].mxu0 %v1435
        %v1584 = vpop.f32.mrb[0].mxu0
        %v1585 = vadd.f32 %v1461, %v1584
        %v1586 = vpop.f32.mrb[0].mxu0
        %1587 = vmatprep.mubr.f32.mxu0 0.0
        %1588 = vmatmul.mubr.f32.gmra.mrb[0].mxu0 %v1436
        %v1589 = vpop.f32.mrb[0].mxu0
        %v1590 = vadd.f32 %v1461, %v1589
        %v1591 = vpop.f32.mrb[0].mxu0
        %1592 = vmatprep.mubr.f32.mxu0 0.0
        %1593 = vmatmul.mubr.f32.gmra.mrb[0].mxu0 %v1437
        %v1594 = vpop.f32.mrb[0].mxu0
        %v1595 = vadd.f32 %v1461, %v1594
        %v1596 = vpop.f32.mrb[0].mxu0
        %1597 = vmatprep.mubr.f32.mxu0 0.0
        %1598 = vmatmul.mubr.f32.gmra.mrb[0].mxu0 %v1438
        %v1599 = vpop.f32.mrb[0].mxu0
        %v1600 = vadd.f32 %v1461, %v1599
        %v1601 = vpop.f32.mrb[0].mxu0
        %1602 = vmatprep.mubr.f32.mxu0 0.0
        %1603 = vmatmul.mubr.f32.gmra.mrb[0].mxu0 %v1439
        %v1604 = vpop.f32.mrb[0].mxu0
        %v1605 = vadd.f32 %v1461, %v1604
        %v1606 = vpop.f32.mrb[0].mxu0
        %1607 = vdwg.mxu0
        %vm1608 = vcmask 7168
        %1609 = vst.msk [vmem:[%s270] sm:$0xff] %vm1608, %v1530
        %1610 = vst.msk [vmem:[%s270 + $0x8] sm:$0xff] %vm1608, %v1535
        %1611 = vst.msk [vmem:[%s270 + $0x10] sm:$0xff] %vm1608, %v1540
        %1612 = vst.msk [vmem:[%s270 + $0x18] sm:$0xff] %vm1608, %v1545
        %1613 = vst.msk [vmem:[%s270 + $0x20] sm:$0xff] %vm1608, %v1550
        %1614 = vst.msk [vmem:[%s270 + $0x28] sm:$0xff] %vm1608, %v1555
        %1615 = vst.msk [vmem:[%s270 + $0x30] sm:$0xff] %vm1608, %v1560
        %1616 = vst.msk [vmem:[%s270 + $0x38] sm:$0xff] %vm1608, %v1565
        %1617 = vst.msk [vmem:[%s270 + $0x40] sm:$0xff] %vm1608, %v1570
        %1618 = vst.msk [vmem:[%s270 + $0x48] sm:$0xff] %vm1608, %v1575
        %1619 = vst.msk [vmem:[%s270 + $0x50] sm:$0xff] %vm1608, %v1580
        %1620 = vst.msk [vmem:[%s270 + $0x58] sm:$0xff] %vm1608, %v1585
        %1621 = vst.msk [vmem:[%s270 + $0x60] sm:$0xff] %vm1608, %v1590
        %1622 = vst.msk [vmem:[%s270 + $0x68] sm:$0xff] %vm1608, %v1595
        %1623 = vst.msk [vmem:[%s270 + $0x70] sm:$0xff] %vm1608, %v1600
        %1624 = vst.msk [vmem:[%s270 + $0x78] sm:$0xff] %vm1608, %v1605
        %s1625 = smul.u32 16, %s20
        %p1626 = scmp.lt.s32.totalorder %s1625, 31
        %s1627 = scalar_select %p1626, %s1625, 31
        %s1628 = smul.addr %s1627, 8
        %s1629 = scalar_lea.vmem %s6, %s1628
        // Predicated region
        $region49: #{tpu_custom_call.1} parent=43 // pred_check
          %p1630 = pneg %p169
        $region50: #{tpu_custom_call.1} parent=43 // pred_check_branch
          %1632 = sbr.rel (%p1630) target = $region52
        $region51: #{tpu_custom_call.1} parent=43 // pred_region
          %s1633 = smul.u32 16, %s20
        $region52: #{tpu_custom_call.1} parent=43 // pred_fallthru
          _
      $region44: #{tpu_custom_call.1} parent=5 // pred_fallthru
        _
      %p1634 = scmp.le.s32.totalorder 2, %s15
      // Predicated region
      $region53: #{tpu_custom_call.1} parent=5 // pred_check
        %p1635 = pneg %p1634
      $region54: #{tpu_custom_call.1} parent=5 // pred_check_branch
        %1637 = sbr.rel (%p1635) target = $region56
      $region55: #{tpu_custom_call.1} parent=5 // pred_region
        %s1638 = ssub.s32 %s15, 2
        // Predicated region
        $region57: #{tpu_custom_call.1} parent=55 // pred_check
          %p1639 = pneg %p175
        $region58: #{tpu_custom_call.1} parent=55 // pred_check_branch
          %1641 = sbr.rel (%p1639) target = $region60
        $region59: #{tpu_custom_call.1} parent=55 // pred_region
          %s1642 = smul.u32 16, %s21
          %p1643 = scmp.lt.s32.totalorder %s1642, 31
          %s1644 = scalar_select %p1643, %s1642, 31
          %s1645 = smul.addr %s1644, 8
          %s1646 = scalar_lea.vmem %s6, %s1645
        $region60: #{tpu_custom_call.1} parent=55 // pred_fallthru
          _
      $region56: #{tpu_custom_call.1} parent=5 // pred_fallthru
        _
    $region6: #{tpu_custom_call.1} parent=1 // loop_footer
      %s19 = sadd.s32 1, %s15
    $region7: #{tpu_custom_call.1} parent=1 // loop_footer_branch
      %14 = sbr.rel target = $region3
    $region8: #{tpu_custom_call.1} parent=1 // loop_exit
      _
    %1647 = vsyncpa [#allocation4], 1
    %s1648 = scalar_lea.sflag [#allocation4], 1
    %1649 = vsyncpa %s1648, 1

</llo_original>
